<compile_context>
chip_gen: v7x
topology: tpu7x:2x2x1
jax: 0.10.0
libtpu: 0.0.40
codegen_flags: <defaults>
</compile_context>

<pallas_src>
import functools
import numbers

import jax
import jax.numpy as jnp
from jax import lax
from jax.experimental import pallas as pl
from jax.experimental.pallas import tpu as pltpu


def _masked_row_minmax(dists, label_row, label_col, row_start, col_start, b_real):
    """Per-row masked max (furthest positive) / min (closest negative) partials
    for one (TM, TC) tile of the distance matrix. Padded columns (>= b_real) are
    excluded from both reductions."""
    tm, tc = dists.shape
    rows = row_start + lax.broadcasted_iota(jnp.int32, (tm, tc), 0)
    cols = col_start + lax.broadcasted_iota(jnp.int32, (tm, tc), 1)
    same = label_row == label_col                       # (TM,1)==(1,TC) -> (TM,TC)
    eye = rows == cols
    valid = cols < b_real
    positive = jnp.logical_and(jnp.logical_xor(same, eye), valid)
    # dists >= 0, so where(pos, dists, 0) reproduces torch's dists * pos.float().
    fp = jnp.max(jnp.where(positive, dists, 0.0), axis=1, keepdims=True)     # (TM,1)
    neg = jnp.where(valid, jnp.where(same, dists + 1e8, dists), jnp.inf)
    cn = jnp.min(neg, axis=1, keepdims=True)                                  # (TM,1)
    return fp, cn


def _semantic_batch_hard_kernel(metric, margin, b_real, mxu_dtype,
                                wv_ref, w_ref, b_ref, x_ref, x_sq_ref,
                                alpha_ref, label_row_ref, label_col_ref,
                                diff_ref, sem_ref):
    tm = wv_ref.shape[0]
    b_pad, d_dim = x_ref.shape
    row_start = pl.multiple_of(pl.program_id(0) * tm, tm)

    # fc: sem_org = wv @ W^T + b   (MXU; operands arrive at mxu_dtype, f32 acc)
    sem_org = jnp.dot(wv_ref[...], w_ref[...],
                      preferred_element_type=jnp.float32) + b_ref[...]        # (TM, D)

    alpha = alpha_ref[...]                                                     # (TM, 1) f32
    x_rows = x_ref[pl.ds(row_start, tm), :].astype(jnp.float32)                # (TM, D)
    sem = alpha * sem_org + (1.0 - alpha) * x_rows                             # (TM, D) f32
    sem_ref[...] = sem.astype(sem_ref.dtype)

    label_row = label_row_ref[...]                                             # (TM, 1) i32

    if metric in ("sqeuclidean", "euclidean"):
        # dists = ||sem||^2 + ||x||^2 - 2 * sem @ x^T  (Gram form on the MXU).
        # ||x||^2 is precomputed in the wrapper (grid-invariant).
        # TODO(synk): verify with pl.lower_as_mlir that Mosaic keeps the resident
        # (B,D) RHS in place for the NT contraction instead of re-transposing per step.
        gram = lax.dot_general(
            sem.astype(mxu_dtype), x_ref[...].astype(mxu_dtype),
            dimension_numbers=(((1,), (1,)), ((), ())),
            preferred_element_type=jnp.float32)                                # (TM, B_pad)
        sem_sq = jnp.sum(sem * sem, axis=1, keepdims=True)                     # (TM, 1)
        d2 = jnp.maximum(sem_sq + x_sq_ref[...] - 2.0 * gram, 0.0)             # clamp cancellation
        if metric == "sqeuclidean":
            dists = d2
        else:  # euclidean: reference adds 1e-16 per element before summing
            dists = jnp.sqrt(d2 + float(d_dim) * 1e-16)
        fp, cn = _masked_row_minmax(dists, label_row, label_col_ref[...],
                                    row_start, 0, b_real)
    elif metric == "cityblock":
        # No MXU form for L1: chunk the column axis (128 wide) and carry running
        # max/min so the (TM, TC, D) intermediate stays bounded for any B.
        tc = 128

        def body(c, carry):
            fp_acc, cn_acc = carry
            col_start = pl.multiple_of(c * tc, tc)
            x_chunk = x_ref[pl.ds(col_start, tc), :].astype(jnp.float32)       # (TC, D)
            dists = jnp.sum(jnp.abs(sem[:, None, :] - x_chunk[None, :, :]),
                            axis=-1)                                           # (TM, TC)
            label_chunk = label_col_ref[:, pl.ds(col_start, tc)]               # (1, TC)
            fp_c, cn_c = _masked_row_minmax(dists, label_row, label_chunk,
                                            row_start, col_start, b_real)
            return jnp.maximum(fp_acc, fp_c), jnp.minimum(cn_acc, cn_c)

        fp0 = jnp.zeros((tm, 1), jnp.float32)          # reference max is always >= 0
        cn0 = jnp.full((tm, 1), jnp.inf, jnp.float32)
        fp, cn = lax.fori_loop(0, b_pad // tc, body, (fp0, cn0))
    else:
        raise ValueError(f"unknown metric {metric!r}")

    diff = fp - cn                                                             # (TM, 1)
    if isinstance(margin, numbers.Real):
        diff = jnp.maximum(diff + float(margin), 0.0)                          # F.relu(diff + margin)
    elif margin == "soft":
        diff = jax.nn.softplus(diff)                                           # F.softplus(diff)
    # else: margin disabled -> raw diff (mirrors the PyTorch fall-through)

    # Lane-dense writeback: (TM,1) -> (1,TM) relayout (XLU), full-lane store.
    diff_ref[...] = diff.reshape(1, tm)


def _pick_row_tile(b_pad):
    """Largest tile in {512, 256, 128} that divides b_pad while keeping >= 2 grid
    steps when possible (so v7x's two TensorCores both get work)."""
    for tm in (512, 256, 128):
        if b_pad % tm == 0 and b_pad // tm >= 2:
            return tm
    return 128                      # b_pad == 128 -> single step


def _vmem_bytes(tm, b_pad, d, wv_dim, x_isize, mxu_isize, metric):
    """Rough per-step VMEM footprint (resident single-buffered, streams double-buffered)."""
    resident = (b_pad * d * x_isize          # x
                + wv_dim * d * mxu_isize     # W^T
                + d * 4                      # bias
                + b_pad * 4                  # ||x||^2
                + b_pad * 4)                 # label cols
    streamed = 2 * (tm * wv_dim * mxu_isize + tm * 4 + tm * 4)    # wv / alpha / label rows
    streamed += 2 * (tm * d * 4 + tm * 4)                         # sem / diff outputs
    if metric == "cityblock":
        inter = tm * 128 * d * 4 + 4 * tm * 128 * 4               # chunked (TM,TC,D) + temps
    else:
        inter = 3 * tm * b_pad * 4 + 2 * tm * d * 4               # dists + where temps
    return resident + streamed + inter


def _resident_spec(shape):
    """Constant-index resident block; single-buffered (no need to double-buffer
    blocks whose index never changes)."""
    try:
        return pl.BlockSpec(shape, lambda i: (0, 0), pipeline_mode=pl.Buffered(1))
    except TypeError:   # older BlockSpec signature without pipeline_mode
        return pl.BlockSpec(shape, lambda i: (0, 0))


def semantic_batch_hard(x, wv, label, fc_weight, fc_bias, alpha, *,
                        metric="sqeuclidean", margin="soft",
                        mxu_dtype=jnp.bfloat16):
    """JAX/Pallas forward. fc_weight is in PyTorch layout (out_features, in_features).

    mxu_dtype: dtype the MXU operands are fed at (bf16 default -> ~3x MXU
    throughput vs f32 passes; pass jnp.float32 for bit-accurate validation).
    alpha stands in for torch.rand(B, 1).
    """
    B, D = x.shape
    WV = wv.shape[1]
    assert fc_weight.shape == (D, WV) and fc_bias.shape == (D,)
    assert alpha.shape == (B, 1) and label.shape == (B,)

    # Pad the batch (lane) axis to a multiple of 128. Padded columns are masked
    # in-kernel; padded rows are sliced off the outputs.
    b_pad = ((B + 127) // 128) * 128
    pad = b_pad - B
    if pad:
        x = jnp.pad(x, ((0, pad), (0, 0)))
        wv = jnp.pad(wv, ((0, pad), (0, 0)))
        alpha = jnp.pad(alpha, ((0, pad), (0, 0)))
        label = jnp.pad(label, ((0, pad),))

    # Note: if fc_weight/fc_bias are static, pre-transpose/cast once outside the
    # jit'd path instead of per call.
    w_t = jnp.transpose(fc_weight).astype(mxu_dtype)               # (WV, D)   resident
    wv_m = wv.astype(mxu_dtype)                                     # (B_pad, WV) row-tiled
    b2 = fc_bias.reshape(1, D).astype(jnp.float32)                  # (1, D)    resident
    x_sq = jnp.sum(x.astype(jnp.float32) ** 2, axis=1).reshape(1, b_pad)  # hoisted ||x||^2
    alpha = alpha.astype(jnp.float32)                               # (B_pad, 1)
    label_row = label.reshape(b_pad, 1).astype(jnp.int32)           # (B_pad, 1)
    label_col = label.reshape(1, b_pad).astype(jnp.int32)           # (1, B_pad) resident

    # Per-generation VMEM budget (v5e/v6e: 128 MiB, v7x: 64 MiB per TensorCore).
    try:
        phys_vmem = pltpu.get_tpu_info().vmem_capacity_bytes
    except Exception:
        phys_vmem = 64 * 1024 * 1024                                # conservative (v7x)
    budget = int(phys_vmem * 0.85)

    x_isize = jnp.dtype(x.dtype).itemsize
    m_isize = jnp.dtype(mxu_dtype).itemsize
    tm = _pick_row_tile(b_pad)
    while tm > 128 and _vmem_bytes(tm, b_pad, D, WV, x_isize, m_isize, metric) > budget:
        tm //= 2
    grid = (b_pad // tm,)
    est = _vmem_bytes(tm, b_pad, D, WV, x_isize, m_isize, metric)
    vmem_limit = int(min(budget, max(2 * est, 32 * 1024 * 1024)))

    kernel = functools.partial(_semantic_batch_hard_kernel, metric, margin, B, mxu_dtype)

    in_specs = [
        pl.BlockSpec((tm, WV), lambda i: (i, 0)),     # wv rows
        _resident_spec((WV, D)),                      # W^T
        _resident_spec((1, D)),                       # bias
        _resident_spec((b_pad, D)),                   # x (single stream: rows + columns)
        _resident_spec((1, b_pad)),                   # ||x||^2
        pl.BlockSpec((tm, 1), lambda i: (i, 0)),      # alpha rows
        pl.BlockSpec((tm, 1), lambda i: (i, 0)),      # label rows
        _resident_spec((1, b_pad)),                   # label cols
    ]
    out_specs = (
        pl.BlockSpec((1, tm), lambda i: (0, i)),      # diff, lane-dense blocks
        pl.BlockSpec((tm, D), lambda i: (i, 0)),      # sem rows
    )

    dist_flops = (3 if metric == "cityblock" else 2) * b_pad * b_pad * D
    bytes_accessed = int(
        x.size * x_isize + wv_m.size * m_isize + w_t.size * m_isize
        + b2.size * 4 + x_sq.size * 4 + alpha.size * 4
        + label_row.size * 4 + label_col.size * 4
        + b_pad * 4 + b_pad * D * 4)
    cost = pl.CostEstimate(
        flops=int(2 * b_pad * WV * D + dist_flops + 10 * b_pad * b_pad),
        transcendentals=int(2 * b_pad if margin == "soft" else 0),
        bytes_accessed=bytes_accessed)

    diff_pad, sem_pad = pl.pallas_call(
        kernel,
        out_shape=(jax.ShapeDtypeStruct((1, b_pad), jnp.float32),
                   jax.ShapeDtypeStruct((b_pad, D), jnp.float32)),
        grid_spec=pltpu.PrefetchScalarGridSpec(
            num_scalar_prefetch=0,
            grid=grid,
            in_specs=in_specs,
            out_specs=out_specs),
        compiler_params=pltpu.CompilerParams(
            dimension_semantics=("parallel",),
            vmem_limit_bytes=vmem_limit),
        cost_estimate=cost,
    )(wv_m, w_t, b2, x, x_sq, alpha, label_row, label_col)

    return diff_pad[0, :B], sem_pad[:B]


def _reference(x, wv, label, fc_weight, fc_bias, alpha, metric, margin,
               mxu_dtype=jnp.float32):
    """Pure-JAX reference of the PyTorch forward. When mxu_dtype != f32 it mirrors
    the kernel's deliberate reduced-precision MXU operands (and Gram-form dists)
    so the test isolates the Pallas translation from that precision choice."""
    f32 = jnp.float32
    sem_org = jnp.dot(wv.astype(mxu_dtype), fc_weight.T.astype(mxu_dtype),
                      preferred_element_type=f32) + fc_bias
    sem = alpha * sem_org + (1.0 - alpha) * x
    if metric in ("sqeuclidean", "euclidean") and mxu_dtype != jnp.float32:
        gram = jnp.dot(sem.astype(mxu_dtype), x.T.astype(mxu_dtype),
                       preferred_element_type=f32)
        d2 = jnp.maximum(jnp.sum(sem * sem, axis=1, keepdims=True)
                         + jnp.sum(x * x, axis=1)[None, :] - 2.0 * gram, 0.0)
        dists = d2 if metric == "sqeuclidean" else jnp.sqrt(d2 + x.shape[1] * 1e-16)
    else:
        diffs = sem[:, None, :] - x[None, :, :]
        if metric == "sqeuclidean":
            dists = jnp.sum(diffs ** 2, axis=-1)
        elif metric == "euclidean":
            dists = jnp.sqrt(jnp.sum(diffs ** 2 + 1e-16, axis=-1))
        else:
            dists = jnp.sum(jnp.abs(diffs), axis=-1)
    same = label[:, None] == label[None, :]
    pos = jnp.logical_xor(same, jnp.eye(label.shape[0], dtype=bool))
    furthest = jnp.max(dists * pos.astype(f32), axis=1)
    closest = jnp.min(dists + 1e8 * same.astype(f32), axis=1)
    d = furthest - closest
    if isinstance(margin, numbers.Real):
        d = jax.nn.relu(d + float(margin))
    elif margin == "soft":
        d = jax.nn.softplus(d)
    return d, sem


def _run_case(B, WV, D, metric, margin, mxu_dtype, seed, diff_tol, sem_tol):
    key = jax.random.PRNGKey(seed)
    k_x, k_wv, k_lab, k_w, k_b, k_a = jax.random.split(key, 6)

    x = jax.random.normal(k_x, (B, D), dtype=jnp.float32)
    wv = jax.random.normal(k_wv, (B, WV), dtype=jnp.float32)
    label = jax.random.randint(k_lab, (B,), 0, max(2, B // 4), dtype=jnp.int32)
    fc_weight = jax.random.normal(k_w, (D, WV), dtype=jnp.float32) * 0.1
    fc_bias = jax.random.normal(k_b, (D,), dtype=jnp.float32) * 0.1
    alpha = jax.random.uniform(k_a, (B, 1), dtype=jnp.float32)  # stands in for torch.rand

    diff, sem = semantic_batch_hard(x, wv, label, fc_weight, fc_bias, alpha,
                                    metric=metric, margin=margin, mxu_dtype=mxu_dtype)
    jax.block_until_ready((diff, sem))
    assert diff.shape == (B,) and sem.shape == (B, D)

    ref_diff, ref_sem = _reference(x, wv, label, fc_weight, fc_bias, alpha,
                                   metric, margin, mxu_dtype=mxu_dtype)
    assert jnp.allclose(diff, ref_diff, atol=diff_tol, rtol=diff_tol), (
        metric, margin, float(jnp.max(jnp.abs(diff - ref_diff))))
    assert jnp.allclose(sem, ref_sem, atol=sem_tol, rtol=sem_tol), (
        metric, float(jnp.max(jnp.abs(sem - ref_sem))))


if __name__ == "__main__":
    # opt: wv_size=16, backbone_nhash=32, metric='sqeuclidean', margin='soft'
    # f32-MXU validation path, tight tolerances (exact Gram-form / masking check).
    _run_case(B=8, WV=16, D=32, metric="sqeuclidean", margin="soft",
              mxu_dtype=jnp.float32, seed=0, diff_tol=1e-3, sem_tol=1e-4)
    # multi-step row-tiled grid (B_pad=256, TM=128, grid=(2,))
    _run_case(B=256, WV=16, D=32, metric="sqeuclidean", margin="soft",
              mxu_dtype=jnp.float32, seed=1, diff_tol=1e-3, sem_tol=1e-4)
    # euclidean + real margin (relu path)
    _run_case(B=8, WV=16, D=32, metric="euclidean", margin=0.3,
              mxu_dtype=jnp.float32, seed=2, diff_tol=1e-3, sem_tol=1e-4)
    # cityblock exercises the column-chunked fused-reduction path;
    # B=200 exercises pad-to-128 + column-validity masking.
    _run_case(B=200, WV=16, D=32, metric="cityblock", margin=0.5,
              mxu_dtype=jnp.float32, seed=3, diff_tol=1e-3, sem_tol=1e-4)
    # default bf16-MXU fast path (reference mirrors the bf16 operand rounding).
    _run_case(B=200, WV=16, D=32, metric="sqeuclidean", margin="soft",
              mxu_dtype=jnp.bfloat16, seed=4, diff_tol=5e-2, sem_tol=1e-3)
    print("KERNEL_OK")
</pallas_src>

<mosaic_0001>
module attributes {stable_mosaic.version = 11 : i64} {
  func.func @_semantic_batch_hard_kernel(%arg0: i32, %arg1: memref<128x16xf32, #tpu.memory_space<vmem>>, %arg2: memref<16x32xf32, #tpu.memory_space<vmem>>, %arg3: memref<1x32xf32, #tpu.memory_space<vmem>>, %arg4: memref<128x32xf32, #tpu.memory_space<vmem>>, %arg5: memref<1x128xf32, #tpu.memory_space<vmem>>, %arg6: memref<128x1xf32, #tpu.memory_space<vmem>>, %arg7: memref<128x1xi32, #tpu.memory_space<vmem>>, %arg8: memref<1x128xi32, #tpu.memory_space<vmem>>, %arg9: memref<1x128xf32, #tpu.memory_space<vmem>>, %arg10: memref<128x32xf32, #tpu.memory_space<vmem>>) attributes {dimension_semantics = [#tpu.dimension_semantics<parallel>], iteration_bounds = array<i64: 1>, scalar_prefetch = 0 : i64, scratch_operands = 0 : i64, tpu.core_type = #tpu.core_type<tc>, window_params = [{transform_indices = @transform_0, window_bounds = array<i64: 128, 16>}, {pipeline_mode = #tpu.pipeline_mode<synchronous>, transform_indices = @transform_1, window_bounds = array<i64: 16, 32>}, {pipeline_mode = #tpu.pipeline_mode<synchronous>, transform_indices = @transform_2, window_bounds = array<i64: 1, 32>}, {pipeline_mode = #tpu.pipeline_mode<synchronous>, transform_indices = @transform_3, window_bounds = array<i64: 128, 32>}, {pipeline_mode = #tpu.pipeline_mode<synchronous>, transform_indices = @transform_4, window_bounds = array<i64: 1, 128>}, {transform_indices = @transform_5, window_bounds = array<i64: 128, 1>}, {transform_indices = @transform_6, window_bounds = array<i64: 128, 1>}, {pipeline_mode = #tpu.pipeline_mode<synchronous>, transform_indices = @transform_7, window_bounds = array<i64: 1, 128>}, {transform_indices = @transform_8, window_bounds = array<i64: 1, 128>}, {transform_indices = @transform_9, window_bounds = array<i64: 128, 32>}]} {
    %c128_i32 = arith.constant 128 : i32
    %0 = arith.muli %arg0, %c128_i32 : i32
    %1 = tpu.assume_multiple %0, 128 : i32
    %c0 = arith.constant 0 : index
    %c0_0 = arith.constant 0 : index
    %2 = vector.load %arg1[%c0, %c0_0] : memref<128x16xf32, #tpu.memory_space<vmem>>, vector<128x16xf32>
    %c0_1 = arith.constant 0 : index
    %c0_2 = arith.constant 0 : index
    %3 = vector.load %arg2[%c0_1, %c0_2] : memref<16x32xf32, #tpu.memory_space<vmem>>, vector<16x32xf32>
    %cst = arith.constant dense<0.000000e+00> : vector<128x32xf32>
    %4 = tpu.matmul %2, %3, %cst {dimension_numbers = #tpu.dot_dimension_numbers<[1], [0], [0], [1], [0, 0, 1, 1], [], []>} : vector<128x16xf32>, vector<16x32xf32>, vector<128x32xf32> -> vector<128x32xf32>
    %c0_3 = arith.constant 0 : index
    %c0_4 = arith.constant 0 : index
    %5 = vector.load %arg3[%c0_3, %c0_4] : memref<1x32xf32, #tpu.memory_space<vmem>>, vector<1x32xf32>
    %6 = vector.broadcast %5 : vector<1x32xf32> to vector<128x32xf32>
    %7 = arith.addf %4, %6 : vector<128x32xf32>
    %c0_5 = arith.constant 0 : index
    %c0_6 = arith.constant 0 : index
    %8 = vector.load %arg6[%c0_5, %c0_6] : memref<128x1xf32, #tpu.memory_space<vmem>>, vector<128x1xf32>
    %9 = arith.index_cast %1 : i32 to index
    %c0_7 = arith.constant 0 : index
    %10 = vector.load %arg4[%9, %c0_7] : memref<128x32xf32, #tpu.memory_space<vmem>>, vector<128x32xf32>
    %11 = vector.broadcast %8 : vector<128x1xf32> to vector<128x32xf32>
    %12 = arith.mulf %11, %7 : vector<128x32xf32>
    %cst_8 = arith.constant 1.000000e+00 : f32
    %13 = vector.broadcast %cst_8 : f32 to vector<128x1xf32>
    %14 = arith.subf %13, %8 : vector<128x1xf32>
    %15 = vector.broadcast %14 : vector<128x1xf32> to vector<128x32xf32>
    %16 = arith.mulf %15, %10 : vector<128x32xf32>
    %17 = arith.addf %12, %16 : vector<128x32xf32>
    %c0_9 = arith.constant 0 : index
    %c0_10 = arith.constant 0 : index
    %18 = vector.load %arg10[%c0_9, %c0_10] : memref<128x32xf32, #tpu.memory_space<vmem>>, vector<128x32xf32>
    tpu.vector_store %arg10[%c0_9, %c0_10], %17 {strides = array<i32>} : memref<128x32xf32, #tpu.memory_space<vmem>>, vector<128x32xf32>,
    %c0_11 = arith.constant 0 : index
    %c0_12 = arith.constant 0 : index
    %19 = vector.load %arg7[%c0_11, %c0_12] : memref<128x1xi32, #tpu.memory_space<vmem>>, vector<128x1xi32>
    %c0_13 = arith.constant 0 : index
    %c0_14 = arith.constant 0 : index
    %20 = vector.load %arg4[%c0_13, %c0_14] : memref<128x32xf32, #tpu.memory_space<vmem>>, vector<128x32xf32>
    %cst_15 = arith.constant dense<0.000000e+00> : vector<128x128xf32>
    %21 = tpu.matmul %17, %20, %cst_15 {dimension_numbers = #tpu.dot_dimension_numbers<[1], [1], [0], [0], [0, 0, 1, 0], [], []>} : vector<128x32xf32>, vector<128x32xf32>, vector<128x128xf32> -> vector<128x128xf32>
    %22 = arith.mulf %17, %17 : vector<128x32xf32>
    %cst_16 = arith.constant dense<0.000000e+00> : vector<128xf32>
    %23 = vector.multi_reduction <add>, %22, %cst_16 [1] : vector<128x32xf32> to vector<128xf32>
    %24 = vector.shape_cast %23 : vector<128xf32> to vector<128x1xf32>
    %c0_17 = arith.constant 0 : index
    %c0_18 = arith.constant 0 : index
    %25 = vector.load %arg5[%c0_17, %c0_18] : memref<1x128xf32, #tpu.memory_space<vmem>>, vector<1x128xf32>
    %26 = vector.broadcast %24 : vector<128x1xf32> to vector<128x128xf32>
    %27 = vector.broadcast %25 : vector<1x128xf32> to vector<128x128xf32>
    %28 = arith.addf %26, %27 : vector<128x128xf32>
    %cst_19 = arith.constant 2.000000e+00 : f32
    %29 = vector.broadcast %cst_19 : f32 to vector<128x128xf32>
    %30 = arith.mulf %29, %21 : vector<128x128xf32>
    %31 = arith.subf %28, %30 : vector<128x128xf32>
    %cst_20 = arith.constant 0.000000e+00 : f32
    %32 = vector.broadcast %cst_20 : f32 to vector<128x128xf32>
    %33 = arith.maximumf %31, %32 : vector<128x128xf32>
    %c0_21 = arith.constant 0 : index
    %c0_22 = arith.constant 0 : index
    %34 = vector.load %arg8[%c0_21, %c0_22] : memref<1x128xi32, #tpu.memory_space<vmem>>, vector<1x128xi32>
    %35 = tpu.iota {dimensions = array<i32: 0>} : vector<128x128xi32>
    %36 = vector.broadcast %1 : i32 to vector<128x128xi32>
    %37 = arith.addi %36, %35 : vector<128x128xi32>
    %38 = tpu.iota {dimensions = array<i32: 1>} : vector<128x128xi32>
    %c0_i32 = arith.constant 0 : i32
    %39 = vector.broadcast %c0_i32 : i32 to vector<128x128xi32>
    %40 = arith.addi %39, %38 : vector<128x128xi32>
    %41 = vector.broadcast %19 : vector<128x1xi32> to vector<128x128xi32>
    %42 = vector.broadcast %34 : vector<1x128xi32> to vector<128x128xi32>
    %43 = arith.cmpi eq, %41, %42 : vector<128x128xi32>
    %44 = arith.cmpi eq, %37, %40 : vector<128x128xi32>
    %c8_i32 = arith.constant 8 : i32
    %45 = vector.broadcast %c8_i32 : i32 to vector<128x128xi32>
    %46 = arith.cmpi slt, %40, %45 : vector<128x128xi32>
    %47 = arith.xori %43, %44 : vector<128x128xi1>
    %48 = arith.andi %47, %46 : vector<128x128xi1>
    %cst_23 = arith.constant 0.000000e+00 : f32
    %49 = vector.broadcast %cst_23 : f32 to vector<128x128xf32>
    %50 = arith.select %48, %33, %49 : vector<128x128xi1>, vector<128x128xf32>
    %cst_24 = arith.constant dense<0xFF800000> : vector<128xf32>
    %51 = vector.multi_reduction <maximumf>, %50, %cst_24 [1] : vector<128x128xf32> to vector<128xf32>
    %52 = vector.shape_cast %51 : vector<128xf32> to vector<128x1xf32>
    %cst_25 = arith.constant 1.000000e+08 : f32
    %53 = vector.broadcast %cst_25 : f32 to vector<128x128xf32>
    %54 = arith.addf %33, %53 : vector<128x128xf32>
    %55 = arith.select %43, %54, %33 : vector<128x128xi1>, vector<128x128xf32>
    %cst_26 = arith.constant 0x7F800000 : f32
    %56 = vector.broadcast %cst_26 : f32 to vector<128x128xf32>
    %57 = arith.select %46, %55, %56 : vector<128x128xi1>, vector<128x128xf32>
    %cst_27 = arith.constant dense<0x7F800000> : vector<128xf32>
    %58 = vector.multi_reduction <minimumf>, %57, %cst_27 [1] : vector<128x128xf32> to vector<128xf32>
    %59 = vector.shape_cast %58 : vector<128xf32> to vector<128x1xf32>
    %60 = arith.subf %52, %59 : vector<128x1xf32>
    %cst_28 = arith.constant 0.000000e+00 : f32
    %61 = vector.broadcast %cst_28 : f32 to vector<128x1xf32>
    %62 = arith.maximumf %60, %61 : vector<128x1xf32>
    %63 = vector.broadcast %cst_28 : f32 to vector<128x1xf32>
    %64 = arith.subf %60, %63 : vector<128x1xf32>
    %65 = arith.cmpf one, %64, %64 : vector<128x1xf32>
    %66 = vector.broadcast %cst_28 : f32 to vector<128x1xf32>
    %67 = arith.addf %60, %66 : vector<128x1xf32>
    %68 = math.absf %64 : vector<128x1xf32>
    %cst_29 = arith.constant 0.000000e+00 : f32
    %69 = vector.broadcast %cst_29 : f32 to vector<128x1xf32>
    %70 = arith.subf %69, %68 : vector<128x1xf32>
    %71 = math.exp %70 : vector<128x1xf32>
    %72 = math.log1p %71 : vector<128x1xf32>
    %73 = arith.addf %62, %72 : vector<128x1xf32>
    %74 = arith.select %65, %67, %73 : vector<128x1xi1>, vector<128x1xf32>
    %75 = vector.shape_cast %74 : vector<128x1xf32> to vector<1x128xf32>
    %c0_30 = arith.constant 0 : index
    %c0_31 = arith.constant 0 : index
    %76 = vector.load %arg9[%c0_30, %c0_31] : memref<1x128xf32, #tpu.memory_space<vmem>>, vector<1x128xf32>
    tpu.vector_store %arg9[%c0_30, %c0_31], %75 {strides = array<i32>} : memref<1x128xf32, #tpu.memory_space<vmem>>, vector<1x128xf32>,
    return
  }
  func.func @transform_0(%arg0: i32) -> (i32, i32) {
    %c0_i32 = arith.constant 0 : i32
    %c0_i32_0 = arith.constant 0 : i32
    return %arg0, %c0_i32 : i32, i32
  }
  func.func @transform_1(%arg0: i32) -> (i32, i32) {
    %c0_i32 = arith.constant 0 : i32
    %c0_i32_0 = arith.constant 0 : i32
    %c0_i32_1 = arith.constant 0 : i32
    return %c0_i32, %c0_i32_0 : i32, i32
  }
  func.func @transform_2(%arg0: i32) -> (i32, i32) {
    %c0_i32 = arith.constant 0 : i32
    %c0_i32_0 = arith.constant 0 : i32
    %c0_i32_1 = arith.constant 0 : i32
    return %c0_i32, %c0_i32_0 : i32, i32
  }
  func.func @transform_3(%arg0: i32) -> (i32, i32) {
    %c0_i32 = arith.constant 0 : i32
    %c0_i32_0 = arith.constant 0 : i32
    %c0_i32_1 = arith.constant 0 : i32
    return %c0_i32, %c0_i32_0 : i32, i32
  }
  func.func @transform_4(%arg0: i32) -> (i32, i32) {
    %c0_i32 = arith.constant 0 : i32
    %c0_i32_0 = arith.constant 0 : i32
    %c0_i32_1 = arith.constant 0 : i32
    return %c0_i32, %c0_i32_0 : i32, i32
  }
  func.func @transform_5(%arg0: i32) -> (i32, i32) {
    %c0_i32 = arith.constant 0 : i32
    %c0_i32_0 = arith.constant 0 : i32
    return %arg0, %c0_i32 : i32, i32
  }
  func.func @transform_6(%arg0: i32) -> (i32, i32) {
    %c0_i32 = arith.constant 0 : i32
    %c0_i32_0 = arith.constant 0 : i32
    return %arg0, %c0_i32 : i32, i32
  }
  func.func @transform_7(%arg0: i32) -> (i32, i32) {
    %c0_i32 = arith.constant 0 : i32
    %c0_i32_0 = arith.constant 0 : i32
    %c0_i32_1 = arith.constant 0 : i32
    return %c0_i32, %c0_i32_0 : i32, i32
  }
  func.func @transform_8(%arg0: i32) -> (i32, i32) {
    %c0_i32 = arith.constant 0 : i32
    %c0_i32_0 = arith.constant 0 : i32
    return %c0_i32, %arg0 : i32, i32
  }
  func.func @transform_9(%arg0: i32) -> (i32, i32) {
    %c0_i32 = arith.constant 0 : i32
    %c0_i32_0 = arith.constant 0 : i32
    return %arg0, %c0_i32 : i32, i32
  }
}

</mosaic_0001>

<llo_original>
// kernel: tpu_custom_call.1
$region0: #{tpu_custom_call.1}
  #allocation0 [shape = 'u32[]', space=smem, size = 0x4, offset = 0x4, fixed_abs, tag = 'smem constant byte address 0x4 - core index']
  #allocation1 [shape = 'u32[144,128]{1,0:T(1,128)}', space=vmem, size = 0x12000, scoped, tag = 'internal scratch']
  %s0 = inlined_call_operand.vmem [shape: f32[128,16], index: 0, kind: input, shape index: {}]
  %s1 = inlined_call_operand.vmem [shape: f32[16,32], index: 1, kind: input, shape index: {}]
  %s2 = inlined_call_operand.vmem [shape: f32[1,32], index: 2, kind: input, shape index: {}]
  %s3 = inlined_call_operand.vmem [shape: f32[128,32], index: 3, kind: input, shape index: {}]
  %s4 = inlined_call_operand.vmem [shape: f32[1,128], index: 4, kind: input, shape index: {}]
  %s5 = inlined_call_operand.vmem [shape: f32[128,1], index: 5, kind: input, shape index: {}]
  %s6 = inlined_call_operand.vmem [shape: s32[128,1], index: 6, kind: input, shape index: {}]
  %s7 = inlined_call_operand.vmem [shape: s32[1,128], index: 7, kind: input, shape index: {}]
  %s8 = inlined_call_operand.hbm [shape: f32[1,128], index: 8, kind: output, shape index: {0}]
  %s9 = inlined_call_operand.vmem [shape: f32[128,32], index: 9, kind: output, shape index: {1}]
  %10 = xla_tuple %s8, %s9
  %s11 = sld [smem:[#allocation0]]
  $region50: #{tpu_custom_call.1} parent=0
    _
  %s13 = ssub.s32 1, %s11
  %s14 = scalar_select 0, %s13, %s11
  $region1: #{tpu_custom_call.1} parent=0
    #allocation2 [shape = 'u8[512]{0}', space=vmem, size = 0x400, scoped, tag = 'output window, operand 0, single buffered']
    #allocation3 [shape = 's32[1]{0}', space=sflag, size = 0x4, scoped, tag = 'scoped memory for tpu_custom_call.1']
    %15 = vsyncpa [#allocation3], 0
    // Predicated region
    $region2: #{tpu_custom_call.1} parent=1 // pred_check
      _
    $region3: #{tpu_custom_call.1} parent=1 // pred_check_branch
      %17 = sbr.rel (0) target = $region5
    $region4: #{tpu_custom_call.1} parent=1 // pred_region
      _
    $region5: #{tpu_custom_call.1} parent=1 // pred_fallthru
      _
    // Predicated region
    $region6: #{tpu_custom_call.1} parent=1 // pred_check
      _
    $region7: #{tpu_custom_call.1} parent=1 // pred_check_branch
      %19 = sbr.rel (0) target = $region9
    $region8: #{tpu_custom_call.1} parent=1 // pred_region
      _
    $region9: #{tpu_custom_call.1} parent=1 // pred_fallthru
      _
    // Predicated region
    $region10: #{tpu_custom_call.1} parent=1 // pred_check
      _
    $region11: #{tpu_custom_call.1} parent=1 // pred_check_branch
      %21 = sbr.rel (0) target = $region13
    $region12: #{tpu_custom_call.1} parent=1 // pred_region
      _
    $region13: #{tpu_custom_call.1} parent=1 // pred_fallthru
      _
    // Predicated region
    $region14: #{tpu_custom_call.1} parent=1 // pred_check
      _
    $region15: #{tpu_custom_call.1} parent=1 // pred_check_branch
      %23 = sbr.rel (0) target = $region17
    $region16: #{tpu_custom_call.1} parent=1 // pred_region
      _
    $region17: #{tpu_custom_call.1} parent=1 // pred_fallthru
      _
    // Predicated region
    $region18: #{tpu_custom_call.1} parent=1 // pred_check
      _
    $region19: #{tpu_custom_call.1} parent=1 // pred_check_branch
      %25 = sbr.rel (0) target = $region21
    $region20: #{tpu_custom_call.1} parent=1 // pred_region
      _
    $region21: #{tpu_custom_call.1} parent=1 // pred_fallthru
      _
    // Predicated region
    $region22: #{tpu_custom_call.1} parent=1 // pred_check
      _
    $region23: #{tpu_custom_call.1} parent=1 // pred_check_branch
      %27 = sbr.rel (0) target = $region25
    $region24: #{tpu_custom_call.1} parent=1 // pred_region
      _
    $region25: #{tpu_custom_call.1} parent=1 // pred_fallthru
      _
    // Predicated region
    $region26: #{tpu_custom_call.1} parent=1 // pred_check
      _
    $region27: #{tpu_custom_call.1} parent=1 // pred_check_branch
      %29 = sbr.rel (0) target = $region29
    $region28: #{tpu_custom_call.1} parent=1 // pred_region
      _
    $region29: #{tpu_custom_call.1} parent=1 // pred_fallthru
      _
    // Predicated region
    $region30: #{tpu_custom_call.1} parent=1 // pred_check
      _
    $region31: #{tpu_custom_call.1} parent=1 // pred_check_branch
      %31 = sbr.rel (0) target = $region33
    $region32: #{tpu_custom_call.1} parent=1 // pred_region
      _
    $region33: #{tpu_custom_call.1} parent=1 // pred_fallthru
      _
    %s32 = smul.u32 0, 128
    %v33 = vld [vmem:[%s0] sm:$0xff]
    %v34 = vld [vmem:[%s0 + $0x8] sm:$0xff]
    %v35 = vld [vmem:[%s0 + $0x10] sm:$0xff]
    %v36 = vld [vmem:[%s0 + $0x18] sm:$0xff]
    %v37 = vld [vmem:[%s0 + $0x20] sm:$0xff]
    %v38 = vld [vmem:[%s0 + $0x28] sm:$0xff]
    %v39 = vld [vmem:[%s0 + $0x30] sm:$0xff]
    %v40 = vld [vmem:[%s0 + $0x38] sm:$0xff]
    %v41 = vld [vmem:[%s0 + $0x40] sm:$0xff]
    %v42 = vld [vmem:[%s0 + $0x48] sm:$0xff]
    %v43 = vld [vmem:[%s0 + $0x50] sm:$0xff]
    %v44 = vld [vmem:[%s0 + $0x58] sm:$0xff]
    %v45 = vld [vmem:[%s0 + $0x60] sm:$0xff]
    %v46 = vld [vmem:[%s0 + $0x68] sm:$0xff]
    %v47 = vld [vmem:[%s0 + $0x70] sm:$0xff]
    %v48 = vld [vmem:[%s0 + $0x78] sm:$0xff]
    %v49 = vld [vmem:[%s1] sm:$0xff]
    %v50 = vld [vmem:[%s1 + $0x8] sm:$0xff]
    %v51 = vld [vmem:[%s2] sm:$0x1]
    %v53 = vlaneseq
    %v54 = vshrl.u32 %v53, 7
    %v55 = vsub.s32 0, %v54
    %v56 = vrot.slane %v51, %v55
    %vm58 = vcmask 130048
    %v60 = vsel %vm58, %v33, 0
    %v63 = vsel %vm58, %v34, 0
    %v66 = vsel %vm58, %v35, 0
    %v69 = vsel %vm58, %v36, 0
    %v72 = vsel %vm58, %v37, 0
    %v75 = vsel %vm58, %v38, 0
    %v78 = vsel %vm58, %v39, 0
    %v81 = vsel %vm58, %v40, 0
    %v84 = vsel %vm58, %v41, 0
    %v87 = vsel %vm58, %v42, 0
    %v90 = vsel %vm58, %v43, 0
    %v93 = vsel %vm58, %v44, 0
    %v96 = vsel %vm58, %v45, 0
    %v99 = vsel %vm58, %v46, 0
    %v102 = vsel %vm58, %v47, 0
    %v105 = vsel %vm58, %v48, 0
    %107 = vmatprep.subr.mxu0 0.0
    %108 = vmatpush1.msra.mxu0 %v49
    %109 = vmatprep.subr.mxu0 0.0
    %110 = vmatpush1.msra.mxu0 %v50
    %111 = vmatprep.subr.mxu0 0.0
    %112 = vmatpush1.msra.mxu0 0.0
    %113 = vmatprep.subr.mxu0 0.0
    %114 = vmatpush1.msra.mxu0 0.0
    %115 = vmatprep.subr.mxu0 0.0
    %116 = vmatpush1.msra.mxu0 0.0
    %117 = vmatprep.subr.mxu0 0.0
    %118 = vmatpush1.msra.mxu0 0.0
    %119 = vmatprep.subr.mxu0 0.0
    %120 = vmatpush1.msra.mxu0 0.0
    %121 = vmatprep.subr.mxu0 0.0
    %122 = vmatpush1.msra.mxu0 0.0
    %123 = vmatprep.subr.mxu0 0.0
    %124 = vmatpush1.msra.mxu0 0.0
    %125 = vmatprep.subr.mxu0 0.0
    %126 = vmatpush1.msra.mxu0 0.0
    %127 = vmatprep.subr.mxu0 0.0
    %128 = vmatpush1.msra.mxu0 0.0
    %129 = vmatprep.subr.mxu0 0.0
    %130 = vmatpush1.msra.mxu0 0.0
    %131 = vmatprep.subr.mxu0 0.0
    %132 = vmatpush1.msra.mxu0 0.0
    %133 = vmatprep.subr.mxu0 0.0
    %134 = vmatpush1.msra.mxu0 0.0
    %135 = vmatprep.subr.mxu0 0.0
    %136 = vmatpush1.msra.mxu0 0.0
    %137 = vmatprep.subr.mxu0 0.0
    %138 = vmatpush1.msra.mxu0 0.0
    %139 = vmatprep.subr.mxu0 0.0
    %140 = vmatpush1.msra.mxu0 0.0
    %141 = vmatprep.subr.mxu0 0.0
    %142 = vmatpush1.msra.mxu0 0.0
    %143 = vmatprep.subr.mxu0 0.0
    %144 = vmatpush1.msra.mxu0 0.0
    %145 = vmatprep.subr.mxu0 0.0
    %146 = vmatpush1.msra.mxu0 0.0
    %147 = vmatprep.subr.mxu0 0.0
    %148 = vmatpush1.msra.mxu0 0.0
    %149 = vmatprep.subr.mxu0 0.0
    %150 = vmatpush1.msra.mxu0 0.0
    %151 = vmatprep.subr.mxu0 0.0
    %152 = vmatpush1.msra.mxu0 0.0
    %153 = vmatprep.subr.mxu0 0.0
    %154 = vmatpush1.msra.mxu0 0.0
    %155 = vmatprep.subr.mxu0 0.0
    %156 = vmatpush1.msra.mxu0 0.0
    %157 = vmatprep.subr.mxu0 0.0
    %158 = vmatpush1.msra.mxu0 0.0
    %159 = vmatprep.subr.mxu0 0.0
    %160 = vmatpush1.msra.mxu0 0.0
    %161 = vmatprep.subr.mxu0 0.0
    %162 = vmatpush1.msra.mxu0 0.0
    %163 = vmatprep.subr.mxu0 0.0
    %164 = vmatpush1.msra.mxu0 0.0
    %165 = vmatprep.subr.mxu0 0.0
    %166 = vmatpush1.msra.mxu0 0.0
    %167 = vmatprep.subr.mxu0 0.0
    %168 = vmatpush1.msra.mxu0 0.0
    %169 = vmatprep.subr.mxu0 0.0
    %170 = vmatpush1.msra.mxu0 0.0
    %171 = vmatprep.mubr.f32.mxu0 0.0
    %172 = vmatmul.mubr.f32.gmra.mrb[0].mxu0 %v60
    %v173 = vpop.f32.mrb[0].mxu0
    %v174 = vadd.f32 %v56, %v173
    %v175 = vpop.f32.mrb[0].mxu0
    %176 = vmatprep.mubr.f32.mxu0 0.0
    %177 = vmatmul.mubr.f32.gmra.mrb[0].mxu0 %v63
    %v178 = vpop.f32.mrb[0].mxu0
    %v179 = vadd.f32 %v56, %v178
    %v180 = vpop.f32.mrb[0].mxu0
    %181 = vmatprep.mubr.f32.mxu0 0.0
    %182 = vmatmul.mubr.f32.gmra.mrb[0].mxu0 %v66
    %v183 = vpop.f32.mrb[0].mxu0
    %v184 = vadd.f32 %v56, %v183
    %v185 = vpop.f32.mrb[0].mxu0
    %186 = vmatprep.mubr.f32.mxu0 0.0
    %187 = vmatmul.mubr.f32.gmra.mrb[0].mxu0 %v69
    %v188 = vpop.f32.mrb[0].mxu0
    %v189 = vadd.f32 %v56, %v188
    %v190 = vpop.f32.mrb[0].mxu0
    %191 = vmatprep.mubr.f32.mxu0 0.0
    %192 = vmatmul.mubr.f32.gmra.mrb[0].mxu0 %v72
    %v193 = vpop.f32.mrb[0].mxu0
    %v194 = vadd.f32 %v56, %v193
    %v195 = vpop.f32.mrb[0].mxu0
    %196 = vmatprep.mubr.f32.mxu0 0.0
    %197 = vmatmul.mubr.f32.gmra.mrb[0].mxu0 %v75
    %v198 = vpop.f32.mrb[0].mxu0
    %v199 = vadd.f32 %v56, %v198
    %v200 = vpop.f32.mrb[0].mxu0
    %201 = vmatprep.mubr.f32.mxu0 0.0
    %202 = vmatmul.mubr.f32.gmra.mrb[0].mxu0 %v78
    %v203 = vpop.f32.mrb[0].mxu0
    %v204 = vadd.f32 %v56, %v203
    %v205 = vpop.f32.mrb[0].mxu0
    %206 = vmatprep.mubr.f32.mxu0 0.0
    %207 = vmatmul.mubr.f32.gmra.mrb[0].mxu0 %v81
    %v208 = vpop.f32.mrb[0].mxu0
    %v209 = vadd.f32 %v56, %v208
    %v210 = vpop.f32.mrb[0].mxu0
    %211 = vmatprep.mubr.f32.mxu0 0.0
    %212 = vmatmul.mubr.f32.gmra.mrb[0].mxu0 %v84
    %v213 = vpop.f32.mrb[0].mxu0
    %v214 = vadd.f32 %v56, %v213
    %v215 = vpop.f32.mrb[0].mxu0
    %216 = vmatprep.mubr.f32.mxu0 0.0
    %217 = vmatmul.mubr.f32.gmra.mrb[0].mxu0 %v87
    %v218 = vpop.f32.mrb[0].mxu0
    %v219 = vadd.f32 %v56, %v218
    %v220 = vpop.f32.mrb[0].mxu0
    %221 = vmatprep.mubr.f32.mxu0 0.0
    %222 = vmatmul.mubr.f32.gmra.mrb[0].mxu0 %v90
    %v223 = vpop.f32.mrb[0].mxu0
    %v224 = vadd.f32 %v56, %v223
    %v225 = vpop.f32.mrb[0].mxu0
    %226 = vmatprep.mubr.f32.mxu0 0.0
    %227 = vmatmul.mubr.f32.gmra.mrb[0].mxu0 %v93
    %v228 = vpop.f32.mrb[0].mxu0
    %v229 = vadd.f32 %v56, %v228
    %v230 = vpop.f32.mrb[0].mxu0
    %231 = vmatprep.mubr.f32.mxu0 0.0
    %232 = vmatmul.mubr.f32.gmra.mrb[0].mxu0 %v96
    %v233 = vpop.f32.mrb[0].mxu0
    %v234 = vadd.f32 %v56, %v233
    %v235 = vpop.f32.mrb[0].mxu0
    %236 = vmatprep.mubr.f32.mxu0 0.0
    %237 = vmatmul.mubr.f32.gmra.mrb[0].mxu0 %v99
    %v238 = vpop.f32.mrb[0].mxu0
    %v239 = vadd.f32 %v56, %v238
    %v240 = vpop.f32.mrb[0].mxu0
    %241 = vmatprep.mubr.f32.mxu0 0.0
    %242 = vmatmul.mubr.f32.gmra.mrb[0].mxu0 %v102
    %v243 = vpop.f32.mrb[0].mxu0
    %v244 = vadd.f32 %v56, %v243
    %v245 = vpop.f32.mrb[0].mxu0
    %246 = vmatprep.mubr.f32.mxu0 0.0
    %247 = vmatmul.mubr.f32.gmra.mrb[0].mxu0 %v105
    %v248 = vpop.f32.mrb[0].mxu0
    %v249 = vadd.f32 %v56, %v248
    %v250 = vpop.f32.mrb[0].mxu0
    %251 = vdwg.mxu0
    %v252 = vld [vmem:[%s5] sm:$0xff]
    %v253 = vld [vmem:[%s5 + $0x8] sm:$0xff]
    %v254 = vld [vmem:[%s5 + $0x10] sm:$0xff]
    %v255 = vld [vmem:[%s5 + $0x18] sm:$0xff]
    %v256 = vld [vmem:[%s5 + $0x20] sm:$0xff]
    %v257 = vld [vmem:[%s5 + $0x28] sm:$0xff]
    %v258 = vld [vmem:[%s5 + $0x30] sm:$0xff]
    %v259 = vld [vmem:[%s5 + $0x38] sm:$0xff]
    %v260 = vld [vmem:[%s5 + $0x40] sm:$0xff]
    %v261 = vld [vmem:[%s5 + $0x48] sm:$0xff]
    %v262 = vld [vmem:[%s5 + $0x50] sm:$0xff]
    %v263 = vld [vmem:[%s5 + $0x58] sm:$0xff]
    %v264 = vld [vmem:[%s5 + $0x60] sm:$0xff]
    %v265 = vld [vmem:[%s5 + $0x68] sm:$0xff]
    %v266 = vld [vmem:[%s5 + $0x70] sm:$0xff]
    %v267 = vld [vmem:[%s5 + $0x78] sm:$0xff]
    %s268 = scalar_lea.vmem %s3, %s32
    %v269 = vld [vmem:[%s268] sm:$0xff]
    %v270 = vld [vmem:[%s268 + $0x8] sm:$0xff]
    %v271 = vld [vmem:[%s268 + $0x10] sm:$0xff]
    %v272 = vld [vmem:[%s268 + $0x18] sm:$0xff]
    %v273 = vld [vmem:[%s268 + $0x20] sm:$0xff]
    %v274 = vld [vmem:[%s268 + $0x28] sm:$0xff]
    %v275 = vld [vmem:[%s268 + $0x30] sm:$0xff]
    %v276 = vld [vmem:[%s268 + $0x38] sm:$0xff]
    %v277 = vld [vmem:[%s268 + $0x40] sm:$0xff]
    %v278 = vld [vmem:[%s268 + $0x48] sm:$0xff]
    %v279 = vld [vmem:[%s268 + $0x50] sm:$0xff]
    %v280 = vld [vmem:[%s268 + $0x58] sm:$0xff]
    %v281 = vld [vmem:[%s268 + $0x60] sm:$0xff]
    %v282 = vld [vmem:[%s268 + $0x68] sm:$0xff]
    %v283 = vld [vmem:[%s268 + $0x70] sm:$0xff]
    %v284 = vld [vmem:[%s268 + $0x78] sm:$0xff]
    %286 = vset.pattern.permute.xlu0 0
    %287 = vperm.xlu0 %286, %v252
    %v288 = vpop.permute.xlu0 %287
    %291 = vset.pattern.permute.xlu0 0
    %292 = vperm.xlu0 %291, %v253
    %v293 = vpop.permute.xlu0 %292
    %296 = vset.pattern.permute.xlu0 0
    %297 = vperm.xlu0 %296, %v254
    %v298 = vpop.permute.xlu0 %297
    %301 = vset.pattern.permute.xlu0 0
    %302 = vperm.xlu0 %301, %v255
    %v303 = vpop.permute.xlu0 %302
    %306 = vset.pattern.permute.xlu0 0
    %307 = vperm.xlu0 %306, %v256
    %v308 = vpop.permute.xlu0 %307
    %311 = vset.pattern.permute.xlu0 0
    %312 = vperm.xlu0 %311, %v257
    %v313 = vpop.permute.xlu0 %312
    %316 = vset.pattern.permute.xlu0 0
    %317 = vperm.xlu0 %316, %v258
    %v318 = vpop.permute.xlu0 %317
    %321 = vset.pattern.permute.xlu0 0
    %322 = vperm.xlu0 %321, %v259
    %v323 = vpop.permute.xlu0 %322
    %326 = vset.pattern.permute.xlu0 0
    %327 = vperm.xlu0 %326, %v260
    %v328 = vpop.permute.xlu0 %327
    %331 = vset.pattern.permute.xlu0 0
    %332 = vperm.xlu0 %331, %v261
    %v333 = vpop.permute.xlu0 %332
    %336 = vset.pattern.permute.xlu0 0
    %337 = vperm.xlu0 %336, %v262
    %v338 = vpop.permute.xlu0 %337
    %341 = vset.pattern.permute.xlu0 0
    %342 = vperm.xlu0 %341, %v263
    %v343 = vpop.permute.xlu0 %342
    %346 = vset.pattern.permute.xlu0 0
    %347 = vperm.xlu0 %346, %v264
    %v348 = vpop.permute.xlu0 %347
    %351 = vset.pattern.permute.xlu0 0
    %352 = vperm.xlu0 %351, %v265
    %v353 = vpop.permute.xlu0 %352
    %356 = vset.pattern.permute.xlu0 0
    %357 = vperm.xlu0 %356, %v266
    %v358 = vpop.permute.xlu0 %357
    %361 = vset.pattern.permute.xlu0 0
    %362 = vperm.xlu0 %361, %v267
    %v363 = vpop.permute.xlu0 %362
    %v365 = vmul.f32 %v288, %v174
    %v366 = vmul.f32 %v293, %v179
    %v367 = vmul.f32 %v298, %v184
    %v368 = vmul.f32 %v303, %v189
    %v369 = vmul.f32 %v308, %v194
    %v370 = vmul.f32 %v313, %v199
    %v371 = vmul.f32 %v318, %v204
    %v372 = vmul.f32 %v323, %v209
    %v373 = vmul.f32 %v328, %v214
    %v374 = vmul.f32 %v333, %v219
    %v375 = vmul.f32 %v338, %v224
    %v376 = vmul.f32 %v343, %v229
    %v377 = vmul.f32 %v348, %v234
    %v378 = vmul.f32 %v353, %v239
    %v379 = vmul.f32 %v358, %v244
    %v380 = vmul.f32 %v363, %v249
    %v381 = vsub.f32 1.0, %v252
    %v382 = vsub.f32 1.0, %v253
    %v383 = vsub.f32 1.0, %v254
    %v384 = vsub.f32 1.0, %v255
    %v385 = vsub.f32 1.0, %v256
    %v386 = vsub.f32 1.0, %v257
    %v387 = vsub.f32 1.0, %v258
    %v388 = vsub.f32 1.0, %v259
    %v389 = vsub.f32 1.0, %v260
    %v390 = vsub.f32 1.0, %v261
    %v391 = vsub.f32 1.0, %v262
    %v392 = vsub.f32 1.0, %v263
    %v393 = vsub.f32 1.0, %v264
    %v394 = vsub.f32 1.0, %v265
    %v395 = vsub.f32 1.0, %v266
    %v396 = vsub.f32 1.0, %v267
    %398 = vset.pattern.permute.xlu0 0
    %399 = vperm.xlu0 %398, %v381
    %v400 = vpop.permute.xlu0 %399
    %403 = vset.pattern.permute.xlu0 0
    %404 = vperm.xlu0 %403, %v382
    %v405 = vpop.permute.xlu0 %404
    %408 = vset.pattern.permute.xlu0 0
    %409 = vperm.xlu0 %408, %v383
    %v410 = vpop.permute.xlu0 %409
    %413 = vset.pattern.permute.xlu0 0
    %414 = vperm.xlu0 %413, %v384
    %v415 = vpop.permute.xlu0 %414
    %418 = vset.pattern.permute.xlu0 0
    %419 = vperm.xlu0 %418, %v385
    %v420 = vpop.permute.xlu0 %419
    %423 = vset.pattern.permute.xlu0 0
    %424 = vperm.xlu0 %423, %v386
    %v425 = vpop.permute.xlu0 %424
    %428 = vset.pattern.permute.xlu0 0
    %429 = vperm.xlu0 %428, %v387
    %v430 = vpop.permute.xlu0 %429
    %433 = vset.pattern.permute.xlu0 0
    %434 = vperm.xlu0 %433, %v388
    %v435 = vpop.permute.xlu0 %434
    %438 = vset.pattern.permute.xlu0 0
    %439 = vperm.xlu0 %438, %v389
    %v440 = vpop.permute.xlu0 %439
    %443 = vset.pattern.permute.xlu0 0
    %444 = vperm.xlu0 %443, %v390
    %v445 = vpop.permute.xlu0 %444
    %448 = vset.pattern.permute.xlu0 0
    %449 = vperm.xlu0 %448, %v391
    %v450 = vpop.permute.xlu0 %449
    %453 = vset.pattern.permute.xlu0 0
    %454 = vperm.xlu0 %453, %v392
    %v455 = vpop.permute.xlu0 %454
    %458 = vset.pattern.permute.xlu0 0
    %459 = vperm.xlu0 %458, %v393
    %v460 = vpop.permute.xlu0 %459
    %463 = vset.pattern.permute.xlu0 0
    %464 = vperm.xlu0 %463, %v394
    %v465 = vpop.permute.xlu0 %464
    %468 = vset.pattern.permute.xlu0 0
    %469 = vperm.xlu0 %468, %v395
    %v470 = vpop.permute.xlu0 %469
    %473 = vset.pattern.permute.xlu0 0
    %474 = vperm.xlu0 %473, %v396
    %v475 = vpop.permute.xlu0 %474
    %v477 = vmul.f32 %v400, %v269
    %v478 = vmul.f32 %v405, %v270
    %v479 = vmul.f32 %v410, %v271
    %v480 = vmul.f32 %v415, %v272
    %v481 = vmul.f32 %v420, %v273
    %v482 = vmul.f32 %v425, %v274
    %v483 = vmul.f32 %v430, %v275
    %v484 = vmul.f32 %v435, %v276
    %v485 = vmul.f32 %v440, %v277
    %v486 = vmul.f32 %v445, %v278
    %v487 = vmul.f32 %v450, %v279
    %v488 = vmul.f32 %v455, %v280
    %v489 = vmul.f32 %v460, %v281
    %v490 = vmul.f32 %v465, %v282
    %v491 = vmul.f32 %v470, %v283
    %v492 = vmul.f32 %v475, %v284
    %v493 = vadd.f32 %v365, %v477
    %v494 = vadd.f32 %v366, %v478
    %v495 = vadd.f32 %v367, %v479
    %v496 = vadd.f32 %v368, %v480
    %v497 = vadd.f32 %v369, %v481
    %v498 = vadd.f32 %v370, %v482
    %v499 = vadd.f32 %v371, %v483
    %v500 = vadd.f32 %v372, %v484
    %v501 = vadd.f32 %v373, %v485
    %v502 = vadd.f32 %v374, %v486
    %v503 = vadd.f32 %v375, %v487
    %v504 = vadd.f32 %v376, %v488
    %v505 = vadd.f32 %v377, %v489
    %v506 = vadd.f32 %v378, %v490
    %v507 = vadd.f32 %v379, %v491
    %v508 = vadd.f32 %v380, %v492
    %vm509 = vcmask 261120
    %510 = vst.msk [vmem:[%s9] sm:$0xff] %vm509, %v493
    %511 = vst.msk [vmem:[%s9 + $0x8] sm:$0xff] %vm509, %v494
    %512 = vst.msk [vmem:[%s9 + $0x10] sm:$0xff] %vm509, %v495
    %513 = vst.msk [vmem:[%s9 + $0x18] sm:$0xff] %vm509, %v496
    %514 = vst.msk [vmem:[%s9 + $0x20] sm:$0xff] %vm509, %v497
    %515 = vst.msk [vmem:[%s9 + $0x28] sm:$0xff] %vm509, %v498
    %516 = vst.msk [vmem:[%s9 + $0x30] sm:$0xff] %vm509, %v499
    %517 = vst.msk [vmem:[%s9 + $0x38] sm:$0xff] %vm509, %v500
    %518 = vst.msk [vmem:[%s9 + $0x40] sm:$0xff] %vm509, %v501
    %519 = vst.msk [vmem:[%s9 + $0x48] sm:$0xff] %vm509, %v502
    %520 = vst.msk [vmem:[%s9 + $0x50] sm:$0xff] %vm509, %v503
    %521 = vst.msk [vmem:[%s9 + $0x58] sm:$0xff] %vm509, %v504
    %522 = vst.msk [vmem:[%s9 + $0x60] sm:$0xff] %vm509, %v505
    %523 = vst.msk [vmem:[%s9 + $0x68] sm:$0xff] %vm509, %v506
    %524 = vst.msk [vmem:[%s9 + $0x70] sm:$0xff] %vm509, %v507
    %525 = vst.msk [vmem:[%s9 + $0x78] sm:$0xff] %vm509, %v508
    %v526 = vld [vmem:[%s6] sm:$0xff]
    %v527 = vld [vmem:[%s6 + $0x8] sm:$0xff]
    %v528 = vld [vmem:[%s6 + $0x10] sm:$0xff]
    %v529 = vld [vmem:[%s6 + $0x18] sm:$0xff]
    %v530 = vld [vmem:[%s6 + $0x20] sm:$0xff]
    %v531 = vld [vmem:[%s6 + $0x28] sm:$0xff]
    %v532 = vld [vmem:[%s6 + $0x30] sm:$0xff]
    %v533 = vld [vmem:[%s6 + $0x38] sm:$0xff]
    %v534 = vld [vmem:[%s6 + $0x40] sm:$0xff]
    %v535 = vld [vmem:[%s6 + $0x48] sm:$0xff]
    %v536 = vld [vmem:[%s6 + $0x50] sm:$0xff]
    %v537 = vld [vmem:[%s6 + $0x58] sm:$0xff]
    %v538 = vld [vmem:[%s6 + $0x60] sm:$0xff]
    %v539 = vld [vmem:[%s6 + $0x68] sm:$0xff]
    %v540 = vld [vmem:[%s6 + $0x70] sm:$0xff]
    %v541 = vld [vmem:[%s6 + $0x78] sm:$0xff]
    %v542 = vld [vmem:[%s3] sm:$0xff]
    %v543 = vld [vmem:[%s3 + $0x8] sm:$0xff]
    %v544 = vld [vmem:[%s3 + $0x10] sm:$0xff]
    %v545 = vld [vmem:[%s3 + $0x18] sm:$0xff]
    %v546 = vld [vmem:[%s3 + $0x20] sm:$0xff]
    %v547 = vld [vmem:[%s3 + $0x28] sm:$0xff]
    %v548 = vld [vmem:[%s3 + $0x30] sm:$0xff]
    %v549 = vld [vmem:[%s3 + $0x38] sm:$0xff]
    %v550 = vld [vmem:[%s3 + $0x40] sm:$0xff]
    %v551 = vld [vmem:[%s3 + $0x48] sm:$0xff]
    %v552 = vld [vmem:[%s3 + $0x50] sm:$0xff]
    %v553 = vld [vmem:[%s3 + $0x58] sm:$0xff]
    %v554 = vld [vmem:[%s3 + $0x60] sm:$0xff]
    %v555 = vld [vmem:[%s3 + $0x68] sm:$0xff]
    %v556 = vld [vmem:[%s3 + $0x70] sm:$0xff]
    %v557 = vld [vmem:[%s3 + $0x78] sm:$0xff]
    %v559 = vsel %vm509, %v493, 0
    %v562 = vsel %vm509, %v494, 0
    %v565 = vsel %vm509, %v495, 0
    %v568 = vsel %vm509, %v496, 0
    %v571 = vsel %vm509, %v497, 0
    %v574 = vsel %vm509, %v498, 0
    %v577 = vsel %vm509, %v499, 0
    %v580 = vsel %vm509, %v500, 0
    %v583 = vsel %vm509, %v501, 0
    %v586 = vsel %vm509, %v502, 0
    %v589 = vsel %vm509, %v503, 0
    %v592 = vsel %vm509, %v504, 0
    %v595 = vsel %vm509, %v505, 0
    %v598 = vsel %vm509, %v506, 0
    %v601 = vsel %vm509, %v507, 0
    %v604 = vsel %vm509, %v508, 0
    %v607 = vsel %vm509, %v542, 0
    %v610 = vsel %vm509, %v543, 0
    %v613 = vsel %vm509, %v544, 0
    %v616 = vsel %vm509, %v545, 0
    %v619 = vsel %vm509, %v546, 0
    %v622 = vsel %vm509, %v547, 0
    %v625 = vsel %vm509, %v548, 0
    %v628 = vsel %vm509, %v549, 0
    %v631 = vsel %vm509, %v550, 0
    %v634 = vsel %vm509, %v551, 0
    %v637 = vsel %vm509, %v552, 0
    %v640 = vsel %vm509, %v553, 0
    %v643 = vsel %vm509, %v554, 0
    %v646 = vsel %vm509, %v555, 0
    %v649 = vsel %vm509, %v556, 0
    %v652 = vsel %vm509, %v557, 0
    %654 = vmatprep.subr.mxu0 0.0
    %655 = vmatpush1.xpose.msra.mxu0 %v607
    %656 = vmatprep.subr.mxu0 0.0
    %657 = vmatpush1.xpose.msra.mxu0 %v610
    %658 = vmatprep.subr.mxu0 0.0
    %659 = vmatpush1.xpose.msra.mxu0 %v613
    %660 = vmatprep.subr.mxu0 0.0
    %661 = vmatpush1.xpose.msra.mxu0 %v616
    %662 = vmatprep.subr.mxu0 0.0
    %663 = vmatpush1.xpose.msra.mxu0 %v619
    %664 = vmatprep.subr.mxu0 0.0
    %665 = vmatpush1.xpose.msra.mxu0 %v622
    %666 = vmatprep.subr.mxu0 0.0
    %667 = vmatpush1.xpose.msra.mxu0 %v625
    %668 = vmatprep.subr.mxu0 0.0
    %669 = vmatpush1.xpose.msra.mxu0 %v628
    %670 = vmatprep.subr.mxu0 0.0
    %671 = vmatpush1.xpose.msra.mxu0 %v631
    %672 = vmatprep.subr.mxu0 0.0
    %673 = vmatpush1.xpose.msra.mxu0 %v634
    %674 = vmatprep.subr.mxu0 0.0
    %675 = vmatpush1.xpose.msra.mxu0 %v637
    %676 = vmatprep.subr.mxu0 0.0
    %677 = vmatpush1.xpose.msra.mxu0 %v640
    %678 = vmatprep.subr.mxu0 0.0
    %679 = vmatpush1.xpose.msra.mxu0 %v643
    %680 = vmatprep.subr.mxu0 0.0
    %681 = vmatpush1.xpose.msra.mxu0 %v646
    %682 = vmatprep.subr.mxu0 0.0
    %683 = vmatpush1.xpose.msra.mxu0 %v649
    %684 = vmatprep.subr.mxu0 0.0
    %685 = vmatpush1.xpose.msra.mxu0 %v652
    %686 = vmatprep.subr.mxu0 0.0
    %687 = vmatpush1.xpose.msra.mxu0 0.0
    %688 = vmatprep.subr.mxu0 0.0
    %689 = vmatpush1.xpose.msra.mxu0 0.0
    %690 = vmatprep.subr.mxu0 0.0
    %691 = vmatpush1.xpose.msra.mxu0 0.0
    %692 = vmatprep.subr.mxu0 0.0
    %693 = vmatpush1.xpose.msra.mxu0 0.0
    %694 = vmatprep.subr.mxu0 0.0
    %695 = vmatpush1.xpose.msra.mxu0 0.0
    %696 = vmatprep.subr.mxu0 0.0
    %697 = vmatpush1.xpose.msra.mxu0 0.0
    %698 = vmatprep.subr.mxu0 0.0
    %699 = vmatpush1.xpose.msra.mxu0 0.0
    %700 = vmatprep.subr.mxu0 0.0
    %701 = vmatpush1.xpose.msra.mxu0 0.0
    %702 = vmatprep.subr.mxu0 0.0
    %703 = vmatpush1.xpose.msra.mxu0 0.0
    %704 = vmatprep.subr.mxu0 0.0
    %705 = vmatpush1.xpose.msra.mxu0 0.0
    %706 = vmatprep.subr.mxu0 0.0
    %707 = vmatpush1.xpose.msra.mxu0 0.0
    %708 = vmatprep.subr.mxu0 0.0
    %709 = vmatpush1.xpose.msra.mxu0 0.0
    %710 = vmatprep.subr.mxu0 0.0
    %711 = vmatpush1.xpose.msra.mxu0 0.0
    %712 = vmatprep.subr.mxu0 0.0
    %713 = vmatpush1.xpose.msra.mxu0 0.0
    %714 = vmatprep.subr.mxu0 0.0
    %715 = vmatpush1.xpose.msra.mxu0 0.0
    %716 = vmatprep.subr.mxu0 0.0
    %717 = vmatpush1.xpose.msra.mxu0 0.0
    %718 = vmatprep.mubr.f32.mxu0 0.0
    %719 = vmatmul.mubr.f32.gmra.mrb[0].mxu0 %v559
    %v720 = vpop.f32.mrb[0].mxu0
    %v721 = vadd.f32 0.0, %v720
    %v722 = vpop.f32.mrb[0].mxu0
    %723 = vmatprep.mubr.f32.mxu0 0.0
    %724 = vmatmul.mubr.f32.gmra.mrb[0].mxu0 %v562
    %v725 = vpop.f32.mrb[0].mxu0
    %v726 = vadd.f32 0.0, %v725
    %v727 = vpop.f32.mrb[0].mxu0
    %728 = vmatprep.mubr.f32.mxu0 0.0
    %729 = vmatmul.mubr.f32.gmra.mrb[0].mxu0 %v565
    %v730 = vpop.f32.mrb[0].mxu0
    %v731 = vadd.f32 0.0, %v730
    %v732 = vpop.f32.mrb[0].mxu0
    %733 = vmatprep.mubr.f32.mxu0 0.0
    %734 = vmatmul.mubr.f32.gmra.mrb[0].mxu0 %v568
    %v735 = vpop.f32.mrb[0].mxu0
    %v736 = vadd.f32 0.0, %v735
    %v737 = vpop.f32.mrb[0].mxu0
    %738 = vmatprep.mubr.f32.mxu0 0.0
    %739 = vmatmul.mubr.f32.gmra.mrb[0].mxu0 %v571
    %v740 = vpop.f32.mrb[0].mxu0
    %v741 = vadd.f32 0.0, %v740
    %v742 = vpop.f32.mrb[0].mxu0
    %743 = vmatprep.mubr.f32.mxu0 0.0
    %744 = vmatmul.mubr.f32.gmra.mrb[0].mxu0 %v574
    %v745 = vpop.f32.mrb[0].mxu0
    %v746 = vadd.f32 0.0, %v745
    %v747 = vpop.f32.mrb[0].mxu0
    %748 = vmatprep.mubr.f32.mxu0 0.0
    %749 = vmatmul.mubr.f32.gmra.mrb[0].mxu0 %v577
    %v750 = vpop.f32.mrb[0].mxu0
    %v751 = vadd.f32 0.0, %v750
    %v752 = vpop.f32.mrb[0].mxu0
    %753 = vmatprep.mubr.f32.mxu0 0.0
    %754 = vmatmul.mubr.f32.gmra.mrb[0].mxu0 %v580
    %v755 = vpop.f32.mrb[0].mxu0
    %v756 = vadd.f32 0.0, %v755
    %v757 = vpop.f32.mrb[0].mxu0
    %758 = vmatprep.mubr.f32.mxu0 0.0
    %759 = vmatmul.mubr.f32.gmra.mrb[0].mxu0 %v583
    %v760 = vpop.f32.mrb[0].mxu0
    %v761 = vadd.f32 0.0, %v760
    %v762 = vpop.f32.mrb[0].mxu0
    %763 = vmatprep.mubr.f32.mxu0 0.0
    %764 = vmatmul.mubr.f32.gmra.mrb[0].mxu0 %v586
    %v765 = vpop.f32.mrb[0].mxu0
    %v766 = vadd.f32 0.0, %v765
    %v767 = vpop.f32.mrb[0].mxu0
    %768 = vmatprep.mubr.f32.mxu0 0.0
    %769 = vmatmul.mubr.f32.gmra.mrb[0].mxu0 %v589
    %v770 = vpop.f32.mrb[0].mxu0
    %v771 = vadd.f32 0.0, %v770
    %v772 = vpop.f32.mrb[0].mxu0
    %773 = vmatprep.mubr.f32.mxu0 0.0
    %774 = vmatmul.mubr.f32.gmra.mrb[0].mxu0 %v592
    %v775 = vpop.f32.mrb[0].mxu0
    %v776 = vadd.f32 0.0, %v775
    %v777 = vpop.f32.mrb[0].mxu0
    %778 = vmatprep.mubr.f32.mxu0 0.0
    %779 = vmatmul.mubr.f32.gmra.mrb[0].mxu0 %v595
    %v780 = vpop.f32.mrb[0].mxu0
    %v781 = vadd.f32 0.0, %v780
    %v782 = vpop.f32.mrb[0].mxu0
    %783 = vmatprep.mubr.f32.mxu0 0.0
    %784 = vmatmul.mubr.f32.gmra.mrb[0].mxu0 %v598
    %v785 = vpop.f32.mrb[0].mxu0
    %v786 = vadd.f32 0.0, %v785
    %v787 = vpop.f32.mrb[0].mxu0
    %788 = vmatprep.mubr.f32.mxu0 0.0
    %789 = vmatmul.mubr.f32.gmra.mrb[0].mxu0 %v601
    %v790 = vpop.f32.mrb[0].mxu0
    %v791 = vadd.f32 0.0, %v790
    %v792 = vpop.f32.mrb[0].mxu0
    %793 = vmatprep.mubr.f32.mxu0 0.0
    %794 = vmatmul.mubr.f32.gmra.mrb[0].mxu0 %v604
    %v795 = vpop.f32.mrb[0].mxu0
    %v796 = vadd.f32 0.0, %v795
    %v797 = vpop.f32.mrb[0].mxu0
    %798 = vdwg.mxu0
    %v799 = vmul.f32 %v493, %v493
    %v800 = vmul.f32 %v494, %v494
    %v801 = vmul.f32 %v495, %v495
    %v802 = vmul.f32 %v496, %v496
    %v803 = vmul.f32 %v497, %v497
    %v804 = vmul.f32 %v498, %v498
    %v805 = vmul.f32 %v499, %v499
    %v806 = vmul.f32 %v500, %v500
    %v807 = vmul.f32 %v501, %v501
    %v808 = vmul.f32 %v502, %v502
    %v809 = vmul.f32 %v503, %v503
    %v810 = vmul.f32 %v504, %v504
    %v811 = vmul.f32 %v505, %v505
    %v812 = vmul.f32 %v506, %v506
    %v813 = vmul.f32 %v507, %v507
    %v814 = vmul.f32 %v508, %v508
    %v815 = vsel %vm509, %v799, 0.0
    %816 = vadd.xlane.f32.xlu0 %v815
    %v817 = vpop.xlane.xlu0 %816
    %v818 = vsel %vm509, %v800, 0.0
    %819 = vadd.xlane.f32.xlu0 %v818
    %v820 = vpop.xlane.xlu0 %819
    %v821 = vsel %vm509, %v801, 0.0
    %822 = vadd.xlane.f32.xlu0 %v821
    %v823 = vpop.xlane.xlu0 %822
    %v824 = vsel %vm509, %v802, 0.0
    %825 = vadd.xlane.f32.xlu0 %v824
    %v826 = vpop.xlane.xlu0 %825
    %v827 = vsel %vm509, %v803, 0.0
    %828 = vadd.xlane.f32.xlu0 %v827
    %v829 = vpop.xlane.xlu0 %828
    %v830 = vsel %vm509, %v804, 0.0
    %831 = vadd.xlane.f32.xlu0 %v830
    %v832 = vpop.xlane.xlu0 %831
    %v833 = vsel %vm509, %v805, 0.0
    %834 = vadd.xlane.f32.xlu0 %v833
    %v835 = vpop.xlane.xlu0 %834
    %v836 = vsel %vm509, %v806, 0.0
    %837 = vadd.xlane.f32.xlu0 %v836
    %v838 = vpop.xlane.xlu0 %837
    %v839 = vsel %vm509, %v807, 0.0
    %840 = vadd.xlane.f32.xlu0 %v839
    %v841 = vpop.xlane.xlu0 %840
    %v842 = vsel %vm509, %v808, 0.0
    %843 = vadd.xlane.f32.xlu0 %v842
    %v844 = vpop.xlane.xlu0 %843
    %v845 = vsel %vm509, %v809, 0.0
    %846 = vadd.xlane.f32.xlu0 %v845
    %v847 = vpop.xlane.xlu0 %846
    %v848 = vsel %vm509, %v810, 0.0
    %849 = vadd.xlane.f32.xlu0 %v848
    %v850 = vpop.xlane.xlu0 %849
    %v851 = vsel %vm509, %v811, 0.0
    %852 = vadd.xlane.f32.xlu0 %v851
    %v853 = vpop.xlane.xlu0 %852
    %v854 = vsel %vm509, %v812, 0.0
    %855 = vadd.xlane.f32.xlu0 %v854
    %v856 = vpop.xlane.xlu0 %855
    %v857 = vsel %vm509, %v813, 0.0
    %858 = vadd.xlane.f32.xlu0 %v857
    %v859 = vpop.xlane.xlu0 %858
    %v860 = vsel %vm509, %v814, 0.0
    %861 = vadd.xlane.f32.xlu0 %v860
    %v862 = vpop.xlane.xlu0 %861
    %v863 = vld [vmem:[%s4] sm:$0x1]
    %v865 = vlaneseq
    %v866 = vshrl.u32 %v865, 7
    %v867 = vsub.s32 0, %v866
    %v868 = vrot.slane %v863, %v867
    %v870 = vadd.f32 %v817, %v868
    %v871 = vadd.f32 %v820, %v868
    %v872 = vadd.f32 %v823, %v868
    %v873 = vadd.f32 %v826, %v868
    %v874 = vadd.f32 %v829, %v868
    %v875 = vadd.f32 %v832, %v868
    %v876 = vadd.f32 %v835, %v868
    %v877 = vadd.f32 %v838, %v868
    %v878 = vadd.f32 %v841, %v868
    %v879 = vadd.f32 %v844, %v868
    %v880 = vadd.f32 %v847, %v868
    %v881 = vadd.f32 %v850, %v868
    %v882 = vadd.f32 %v853, %v868
    %v883 = vadd.f32 %v856, %v868
    %v884 = vadd.f32 %v859, %v868
    %v885 = vadd.f32 %v862, %v868
    %v886 = vmul.f32 %v721, 2.0
    %v887 = vmul.f32 %v726, 2.0
    %v888 = vmul.f32 %v731, 2.0
    %v889 = vmul.f32 %v736, 2.0
    %v890 = vmul.f32 %v741, 2.0
    %v891 = vmul.f32 %v746, 2.0
    %v892 = vmul.f32 %v751, 2.0
    %v893 = vmul.f32 %v756, 2.0
    %v894 = vmul.f32 %v761, 2.0
    %v895 = vmul.f32 %v766, 2.0
    %v896 = vmul.f32 %v771, 2.0
    %v897 = vmul.f32 %v776, 2.0
    %v898 = vmul.f32 %v781, 2.0
    %v899 = vmul.f32 %v786, 2.0
    %v900 = vmul.f32 %v791, 2.0
    %v901 = vmul.f32 %v796, 2.0
    %v902 = vsub.f32 %v870, %v886
    %v903 = vsub.f32 %v871, %v887
    %v904 = vsub.f32 %v872, %v888
    %v905 = vsub.f32 %v873, %v889
    %v906 = vsub.f32 %v874, %v890
    %v907 = vsub.f32 %v875, %v891
    %v908 = vsub.f32 %v876, %v892
    %v909 = vsub.f32 %v877, %v893
    %v910 = vsub.f32 %v878, %v894
    %v911 = vsub.f32 %v879, %v895
    %v912 = vsub.f32 %v880, %v896
    %v913 = vsub.f32 %v881, %v897
    %v914 = vsub.f32 %v882, %v898
    %v915 = vsub.f32 %v883, %v899
    %v916 = vsub.f32 %v884, %v900
    %v917 = vsub.f32 %v885, %v901
    %v918 = vmax.f32 %v902, 0.0
    %v919 = vmax.f32 %v903, 0.0
    %v920 = vmax.f32 %v904, 0.0
    %v921 = vmax.f32 %v905, 0.0
    %v922 = vmax.f32 %v906, 0.0
    %v923 = vmax.f32 %v907, 0.0
    %v924 = vmax.f32 %v908, 0.0
    %v925 = vmax.f32 %v909, 0.0
    %v926 = vmax.f32 %v910, 0.0
    %v927 = vmax.f32 %v911, 0.0
    %v928 = vmax.f32 %v912, 0.0
    %v929 = vmax.f32 %v913, 0.0
    %v930 = vmax.f32 %v914, 0.0
    %v931 = vmax.f32 %v915, 0.0
    %v932 = vmax.f32 %v916, 0.0
    %v933 = vmax.f32 %v917, 0.0
    %v934 = vld [vmem:[%s7] sm:$0x1]
    %v935 = vlaneseq
    %v936 = vshrl.u32 %v935, 7
    %v937 = vadd.s32 %v936, 8
    %v938 = vadd.s32 %v936, 16
    %v939 = vadd.s32 %v936, 24
    %v940 = vadd.s32 %v936, 32
    %v941 = vadd.s32 %v936, 40
    %v942 = vadd.s32 %v936, 48
    %v943 = vadd.s32 %v936, 56
    %v944 = vadd.s32 %v936, 64
    %v945 = vadd.s32 %v936, 72
    %v946 = vadd.s32 %v936, 80
    %v947 = vadd.s32 %v936, 88
    %v948 = vadd.s32 %v936, 96
    %v949 = vadd.s32 %v936, 104
    %v950 = vadd.s32 %v936, 112
    %v951 = vadd.s32 %v936, 120
    %v952 = vstv %s32
    %v953 = vadd.s32 %v952, %v936
    %v954 = vadd.s32 %v952, %v937
    %v955 = vadd.s32 %v952, %v938
    %v956 = vadd.s32 %v952, %v939
    %v957 = vadd.s32 %v952, %v940
    %v958 = vadd.s32 %v952, %v941
    %v959 = vadd.s32 %v952, %v942
    %v960 = vadd.s32 %v952, %v943
    %v961 = vadd.s32 %v952, %v944
    %v962 = vadd.s32 %v952, %v945
    %v963 = vadd.s32 %v952, %v946
    %v964 = vadd.s32 %v952, %v947
    %v965 = vadd.s32 %v952, %v948
    %v966 = vadd.s32 %v952, %v949
    %v967 = vadd.s32 %v952, %v950
    %v968 = vadd.s32 %v952, %v951
    %v969 = vlaneseq
    %v970 = vand.u32 %v969, 127
    %971 = vset.pattern.permute.xlu0 0
    %972 = vperm.xlu0 %971, %v526
    %v973 = vpop.permute.xlu0 %972
    %974 = vset.pattern.permute.xlu0 0
    %975 = vperm.xlu0 %974, %v527
    %v976 = vpop.permute.xlu0 %975
    %977 = vset.pattern.permute.xlu0 0
    %978 = vperm.xlu0 %977, %v528
    %v979 = vpop.permute.xlu0 %978
    %980 = vset.pattern.permute.xlu0 0
    %981 = vperm.xlu0 %980, %v529
    %v982 = vpop.permute.xlu0 %981
    %983 = vset.pattern.permute.xlu0 0
    %984 = vperm.xlu0 %983, %v530
    %v985 = vpop.permute.xlu0 %984
    %986 = vset.pattern.permute.xlu0 0
    %987 = vperm.xlu0 %986, %v531
    %v988 = vpop.permute.xlu0 %987
    %989 = vset.pattern.permute.xlu0 0
    %990 = vperm.xlu0 %989, %v532
    %v991 = vpop.permute.xlu0 %990
    %992 = vset.pattern.permute.xlu0 0
    %993 = vperm.xlu0 %992, %v533
    %v994 = vpop.permute.xlu0 %993
    %995 = vset.pattern.permute.xlu0 0
    %996 = vperm.xlu0 %995, %v534
    %v997 = vpop.permute.xlu0 %996
    %998 = vset.pattern.permute.xlu0 0
    %999 = vperm.xlu0 %998, %v535
    %v1000 = vpop.permute.xlu0 %999
    %1001 = vset.pattern.permute.xlu0 0
    %1002 = vperm.xlu0 %1001, %v536
    %v1003 = vpop.permute.xlu0 %1002
    %1004 = vset.pattern.permute.xlu0 0
    %1005 = vperm.xlu0 %1004, %v537
    %v1006 = vpop.permute.xlu0 %1005
    %1007 = vset.pattern.permute.xlu0 0
    %1008 = vperm.xlu0 %1007, %v538
    %v1009 = vpop.permute.xlu0 %1008
    %1010 = vset.pattern.permute.xlu0 0
    %1011 = vperm.xlu0 %1010, %v539
    %v1012 = vpop.permute.xlu0 %1011
    %1013 = vset.pattern.permute.xlu0 0
    %1014 = vperm.xlu0 %1013, %v540
    %v1015 = vpop.permute.xlu0 %1014
    %1016 = vset.pattern.permute.xlu0 0
    %1017 = vperm.xlu0 %1016, %v541
    %v1018 = vpop.permute.xlu0 %1017
    %v1019 = vlaneseq
    %v1020 = vshrl.u32 %v1019, 7
    %v1021 = vsub.s32 0, %v1020
    %v1022 = vrot.slane %v934, %v1021
    %vm1023 = vcmp.eq.s32.totalorder %v973, %v1022
    %vm1024 = vcmp.eq.s32.totalorder %v976, %v1022
    %vm1025 = vcmp.eq.s32.totalorder %v979, %v1022
    %vm1026 = vcmp.eq.s32.totalorder %v982, %v1022
    %vm1027 = vcmp.eq.s32.totalorder %v985, %v1022
    %vm1028 = vcmp.eq.s32.totalorder %v988, %v1022
    %vm1029 = vcmp.eq.s32.totalorder %v991, %v1022
    %vm1030 = vcmp.eq.s32.totalorder %v994, %v1022
    %vm1031 = vcmp.eq.s32.totalorder %v997, %v1022
    %vm1032 = vcmp.eq.s32.totalorder %v1000, %v1022
    %vm1033 = vcmp.eq.s32.totalorder %v1003, %v1022
    %vm1034 = vcmp.eq.s32.totalorder %v1006, %v1022
    %vm1035 = vcmp.eq.s32.totalorder %v1009, %v1022
    %vm1036 = vcmp.eq.s32.totalorder %v1012, %v1022
    %vm1037 = vcmp.eq.s32.totalorder %v1015, %v1022
    %vm1038 = vcmp.eq.s32.totalorder %v1018, %v1022
    %vm1039 = vcmp.eq.s32.totalorder %v953, %v970
    %vm1040 = vcmp.eq.s32.totalorder %v954, %v970
    %vm1041 = vcmp.eq.s32.totalorder %v955, %v970
    %vm1042 = vcmp.eq.s32.totalorder %v956, %v970
    %vm1043 = vcmp.eq.s32.totalorder %v957, %v970
    %vm1044 = vcmp.eq.s32.totalorder %v958, %v970
    %vm1045 = vcmp.eq.s32.totalorder %v959, %v970
    %vm1046 = vcmp.eq.s32.totalorder %v960, %v970
    %vm1047 = vcmp.eq.s32.totalorder %v961, %v970
    %vm1048 = vcmp.eq.s32.totalorder %v962, %v970
    %vm1049 = vcmp.eq.s32.totalorder %v963, %v970
    %vm1050 = vcmp.eq.s32.totalorder %v964, %v970
    %vm1051 = vcmp.eq.s32.totalorder %v965, %v970
    %vm1052 = vcmp.eq.s32.totalorder %v966, %v970
    %vm1053 = vcmp.eq.s32.totalorder %v967, %v970
    %vm1054 = vcmp.eq.s32.totalorder %v968, %v970
    %vm1055 = vcmp.lt.s32.totalorder %v970, 8
    %vm1056 = vmxor %vm1023, %vm1039
    %vm1057 = vmxor %vm1024, %vm1040
    %vm1058 = vmxor %vm1025, %vm1041
    %vm1059 = vmxor %vm1026, %vm1042
    %vm1060 = vmxor %vm1027, %vm1043
    %vm1061 = vmxor %vm1028, %vm1044
    %vm1062 = vmxor %vm1029, %vm1045
    %vm1063 = vmxor %vm1030, %vm1046
    %vm1064 = vmxor %vm1031, %vm1047
    %vm1065 = vmxor %vm1032, %vm1048
    %vm1066 = vmxor %vm1033, %vm1049
    %vm1067 = vmxor %vm1034, %vm1050
    %vm1068 = vmxor %vm1035, %vm1051
    %vm1069 = vmxor %vm1036, %vm1052
    %vm1070 = vmxor %vm1037, %vm1053
    %vm1071 = vmxor %vm1038, %vm1054
    %vm1072 = vmand %vm1056, %vm1055
    %vm1073 = vmand %vm1057, %vm1055
    %vm1074 = vmand %vm1058, %vm1055
    %vm1075 = vmand %vm1059, %vm1055
    %vm1076 = vmand %vm1060, %vm1055
    %vm1077 = vmand %vm1061, %vm1055
    %vm1078 = vmand %vm1062, %vm1055
    %vm1079 = vmand %vm1063, %vm1055
    %vm1080 = vmand %vm1064, %vm1055
    %vm1081 = vmand %vm1065, %vm1055
    %vm1082 = vmand %vm1066, %vm1055
    %vm1083 = vmand %vm1067, %vm1055
    %vm1084 = vmand %vm1068, %vm1055
    %vm1085 = vmand %vm1069, %vm1055
    %vm1086 = vmand %vm1070, %vm1055
    %vm1087 = vmand %vm1071, %vm1055
    %v1088 = vsel %vm1072, %v918, 0.0
    %v1089 = vsel %vm1073, %v919, 0.0
    %v1090 = vsel %vm1074, %v920, 0.0
    %v1091 = vsel %vm1075, %v921, 0.0
    %v1092 = vsel %vm1076, %v922, 0.0
    %v1093 = vsel %vm1077, %v923, 0.0
    %v1094 = vsel %vm1078, %v924, 0.0
    %v1095 = vsel %vm1079, %v925, 0.0
    %v1096 = vsel %vm1080, %v926, 0.0
    %v1097 = vsel %vm1081, %v927, 0.0
    %v1098 = vsel %vm1082, %v928, 0.0
    %v1099 = vsel %vm1083, %v929, 0.0
    %v1100 = vsel %vm1084, %v930, 0.0
    %v1101 = vsel %vm1085, %v931, 0.0
    %v1102 = vsel %vm1086, %v932, 0.0
    %v1103 = vsel %vm1087, %v933, 0.0
    %1104 = vmax.xlane.f32.xlu0 %v1088
    %v1105 = vpop.xlane.xlu0 %1104
    %1106 = vmax.xlane.f32.xlu0 %v1089
    %v1107 = vpop.xlane.xlu0 %1106
    %1108 = vmax.xlane.f32.xlu0 %v1090
    %v1109 = vpop.xlane.xlu0 %1108
    %1110 = vmax.xlane.f32.xlu0 %v1091
    %v1111 = vpop.xlane.xlu0 %1110
    %1112 = vmax.xlane.f32.xlu0 %v1092
    %v1113 = vpop.xlane.xlu0 %1112
    %1114 = vmax.xlane.f32.xlu0 %v1093
    %v1115 = vpop.xlane.xlu0 %1114
    %1116 = vmax.xlane.f32.xlu0 %v1094
    %v1117 = vpop.xlane.xlu0 %1116
    %1118 = vmax.xlane.f32.xlu0 %v1095
    %v1119 = vpop.xlane.xlu0 %1118
    %1120 = vmax.xlane.f32.xlu0 %v1096
    %v1121 = vpop.xlane.xlu0 %1120
    %1122 = vmax.xlane.f32.xlu0 %v1097
    %v1123 = vpop.xlane.xlu0 %1122
    %1124 = vmax.xlane.f32.xlu0 %v1098
    %v1125 = vpop.xlane.xlu0 %1124
    %1126 = vmax.xlane.f32.xlu0 %v1099
    %v1127 = vpop.xlane.xlu0 %1126
    %1128 = vmax.xlane.f32.xlu0 %v1100
    %v1129 = vpop.xlane.xlu0 %1128
    %1130 = vmax.xlane.f32.xlu0 %v1101
    %v1131 = vpop.xlane.xlu0 %1130
    %1132 = vmax.xlane.f32.xlu0 %v1102
    %v1133 = vpop.xlane.xlu0 %1132
    %1134 = vmax.xlane.f32.xlu0 %v1103
    %v1135 = vpop.xlane.xlu0 %1134
    %v1136 = vadd.f32 %v918, 1e+08
    %v1137 = vadd.f32 %v919, 1e+08
    %v1138 = vadd.f32 %v920, 1e+08
    %v1139 = vadd.f32 %v921, 1e+08
    %v1140 = vadd.f32 %v922, 1e+08
    %v1141 = vadd.f32 %v923, 1e+08
    %v1142 = vadd.f32 %v924, 1e+08
    %v1143 = vadd.f32 %v925, 1e+08
    %v1144 = vadd.f32 %v926, 1e+08
    %v1145 = vadd.f32 %v927, 1e+08
    %v1146 = vadd.f32 %v928, 1e+08
    %v1147 = vadd.f32 %v929, 1e+08
    %v1148 = vadd.f32 %v930, 1e+08
    %v1149 = vadd.f32 %v931, 1e+08
    %v1150 = vadd.f32 %v932, 1e+08
    %v1151 = vadd.f32 %v933, 1e+08
    %v1152 = vsel %vm1023, %v1136, %v918
    %v1153 = vsel %vm1024, %v1137, %v919
    %v1154 = vsel %vm1025, %v1138, %v920
    %v1155 = vsel %vm1026, %v1139, %v921
    %v1156 = vsel %vm1027, %v1140, %v922
    %v1157 = vsel %vm1028, %v1141, %v923
    %v1158 = vsel %vm1029, %v1142, %v924
    %v1159 = vsel %vm1030, %v1143, %v925
    %v1160 = vsel %vm1031, %v1144, %v926
    %v1161 = vsel %vm1032, %v1145, %v927
    %v1162 = vsel %vm1033, %v1146, %v928
    %v1163 = vsel %vm1034, %v1147, %v929
    %v1164 = vsel %vm1035, %v1148, %v930
    %v1165 = vsel %vm1036, %v1149, %v931
    %v1166 = vsel %vm1037, %v1150, %v932
    %v1167 = vsel %vm1038, %v1151, %v933
    %v1168 = vsel %vm1055, %v1152, inf
    %v1169 = vsel %vm1055, %v1153, inf
    %v1170 = vsel %vm1055, %v1154, inf
    %v1171 = vsel %vm1055, %v1155, inf
    %v1172 = vsel %vm1055, %v1156, inf
    %v1173 = vsel %vm1055, %v1157, inf
    %v1174 = vsel %vm1055, %v1158, inf
    %v1175 = vsel %vm1055, %v1159, inf
    %v1176 = vsel %vm1055, %v1160, inf
    %v1177 = vsel %vm1055, %v1161, inf
    %v1178 = vsel %vm1055, %v1162, inf
    %v1179 = vsel %vm1055, %v1163, inf
    %v1180 = vsel %vm1055, %v1164, inf
    %v1181 = vsel %vm1055, %v1165, inf
    %v1182 = vsel %vm1055, %v1166, inf
    %v1183 = vsel %vm1055, %v1167, inf
    %1184 = vmin.xlane.f32.xlu0 %v1168
    %v1185 = vpop.xlane.xlu0 %1184
    %1186 = vmin.xlane.f32.xlu0 %v1169
    %v1187 = vpop.xlane.xlu0 %1186
    %1188 = vmin.xlane.f32.xlu0 %v1170
    %v1189 = vpop.xlane.xlu0 %1188
    %1190 = vmin.xlane.f32.xlu0 %v1171
    %v1191 = vpop.xlane.xlu0 %1190
    %1192 = vmin.xlane.f32.xlu0 %v1172
    %v1193 = vpop.xlane.xlu0 %1192
    %1194 = vmin.xlane.f32.xlu0 %v1173
    %v1195 = vpop.xlane.xlu0 %1194
    %1196 = vmin.xlane.f32.xlu0 %v1174
    %v1197 = vpop.xlane.xlu0 %1196
    %1198 = vmin.xlane.f32.xlu0 %v1175
    %v1199 = vpop.xlane.xlu0 %1198
    %1200 = vmin.xlane.f32.xlu0 %v1176
    %v1201 = vpop.xlane.xlu0 %1200
    %1202 = vmin.xlane.f32.xlu0 %v1177
    %v1203 = vpop.xlane.xlu0 %1202
    %1204 = vmin.xlane.f32.xlu0 %v1178
    %v1205 = vpop.xlane.xlu0 %1204
    %1206 = vmin.xlane.f32.xlu0 %v1179
    %v1207 = vpop.xlane.xlu0 %1206
    %1208 = vmin.xlane.f32.xlu0 %v1180
    %v1209 = vpop.xlane.xlu0 %1208
    %1210 = vmin.xlane.f32.xlu0 %v1181
    %v1211 = vpop.xlane.xlu0 %1210
    %1212 = vmin.xlane.f32.xlu0 %v1182
    %v1213 = vpop.xlane.xlu0 %1212
    %1214 = vmin.xlane.f32.xlu0 %v1183
    %v1215 = vpop.xlane.xlu0 %1214
    %v1216 = vsub.f32 %v1105, %v1185
    %v1217 = vsub.f32 %v1107, %v1187
    %v1218 = vsub.f32 %v1109, %v1189
    %v1219 = vsub.f32 %v1111, %v1191
    %v1220 = vsub.f32 %v1113, %v1193
    %v1221 = vsub.f32 %v1115, %v1195
    %v1222 = vsub.f32 %v1117, %v1197
    %v1223 = vsub.f32 %v1119, %v1199
    %v1224 = vsub.f32 %v1121, %v1201
    %v1225 = vsub.f32 %v1123, %v1203
    %v1226 = vsub.f32 %v1125, %v1205
    %v1227 = vsub.f32 %v1127, %v1207
    %v1228 = vsub.f32 %v1129, %v1209
    %v1229 = vsub.f32 %v1131, %v1211
    %v1230 = vsub.f32 %v1133, %v1213
    %v1231 = vsub.f32 %v1135, %v1215
    %v1232 = vmax.f32 %v1216, 0.0
    %v1233 = vmax.f32 %v1217, 0.0
    %v1234 = vmax.f32 %v1218, 0.0
    %v1235 = vmax.f32 %v1219, 0.0
    %v1236 = vmax.f32 %v1220, 0.0
    %v1237 = vmax.f32 %v1221, 0.0
    %v1238 = vmax.f32 %v1222, 0.0
    %v1239 = vmax.f32 %v1223, 0.0
    %v1240 = vmax.f32 %v1224, 0.0
    %v1241 = vmax.f32 %v1225, 0.0
    %v1242 = vmax.f32 %v1226, 0.0
    %v1243 = vmax.f32 %v1227, 0.0
    %v1244 = vmax.f32 %v1228, 0.0
    %v1245 = vmax.f32 %v1229, 0.0
    %v1246 = vmax.f32 %v1230, 0.0
    %v1247 = vmax.f32 %v1231, 0.0
    %vm1248 = vcmp.ne.f32.partialorder %v1216, %v1216
    %vm1249 = vcmp.ne.f32.partialorder %v1217, %v1217
    %vm1250 = vcmp.ne.f32.partialorder %v1218, %v1218
    %vm1251 = vcmp.ne.f32.partialorder %v1219, %v1219
    %vm1252 = vcmp.ne.f32.partialorder %v1220, %v1220
    %vm1253 = vcmp.ne.f32.partialorder %v1221, %v1221
    %vm1254 = vcmp.ne.f32.partialorder %v1222, %v1222
    %vm1255 = vcmp.ne.f32.partialorder %v1223, %v1223
    %vm1256 = vcmp.ne.f32.partialorder %v1224, %v1224
    %vm1257 = vcmp.ne.f32.partialorder %v1225, %v1225
    %vm1258 = vcmp.ne.f32.partialorder %v1226, %v1226
    %vm1259 = vcmp.ne.f32.partialorder %v1227, %v1227
    %vm1260 = vcmp.ne.f32.partialorder %v1228, %v1228
    %vm1261 = vcmp.ne.f32.partialorder %v1229, %v1229
    %vm1262 = vcmp.ne.f32.partialorder %v1230, %v1230
    %vm1263 = vcmp.ne.f32.partialorder %v1231, %v1231
    %v1264 = vadd.f32 %v1216, 0.0
    %v1265 = vadd.f32 %v1217, 0.0
    %v1266 = vadd.f32 %v1218, 0.0
    %v1267 = vadd.f32 %v1219, 0.0
    %v1268 = vadd.f32 %v1220, 0.0
    %v1269 = vadd.f32 %v1221, 0.0
    %v1270 = vadd.f32 %v1222, 0.0
    %v1271 = vadd.f32 %v1223, 0.0
    %v1272 = vadd.f32 %v1224, 0.0
    %v1273 = vadd.f32 %v1225, 0.0
    %v1274 = vadd.f32 %v1226, 0.0
    %v1275 = vadd.f32 %v1227, 0.0
    %v1276 = vadd.f32 %v1228, 0.0
    %v1277 = vadd.f32 %v1229, 0.0
    %v1278 = vadd.f32 %v1230, 0.0
    %v1279 = vadd.f32 %v1231, 0.0
    %v1280 = vand.u32 2147483647, %v1216
    %v1281 = vand.u32 2147483647, %v1217
    %v1282 = vand.u32 2147483647, %v1218
    %v1283 = vand.u32 2147483647, %v1219
    %v1284 = vand.u32 2147483647, %v1220
    %v1285 = vand.u32 2147483647, %v1221
    %v1286 = vand.u32 2147483647, %v1222
    %v1287 = vand.u32 2147483647, %v1223
    %v1288 = vand.u32 2147483647, %v1224
    %v1289 = vand.u32 2147483647, %v1225
    %v1290 = vand.u32 2147483647, %v1226
    %v1291 = vand.u32 2147483647, %v1227
    %v1292 = vand.u32 2147483647, %v1228
    %v1293 = vand.u32 2147483647, %v1229
    %v1294 = vand.u32 2147483647, %v1230
    %v1295 = vand.u32 2147483647, %v1231
    %v1296 = vsub.f32 0.0, %v1280
    %v1297 = vsub.f32 0.0, %v1281
    %v1298 = vsub.f32 0.0, %v1282
    %v1299 = vsub.f32 0.0, %v1283
    %v1300 = vsub.f32 0.0, %v1284
    %v1301 = vsub.f32 0.0, %v1285
    %v1302 = vsub.f32 0.0, %v1286
    %v1303 = vsub.f32 0.0, %v1287
    %v1304 = vsub.f32 0.0, %v1288
    %v1305 = vsub.f32 0.0, %v1289
    %v1306 = vsub.f32 0.0, %v1290
    %v1307 = vsub.f32 0.0, %v1291
    %v1308 = vsub.f32 0.0, %v1292
    %v1309 = vsub.f32 0.0, %v1293
    %v1310 = vsub.f32 0.0, %v1294
    %v1311 = vsub.f32 0.0, %v1295
    %v1312 = vmul.f32 %v1296, 1.442695
    %v1313 = vpow.pop %v1312
    %v1314 = vmul.f32 %v1297, 1.442695
    %v1315 = vpow.pop %v1314
    %v1316 = vmul.f32 %v1298, 1.442695
    %v1317 = vpow.pop %v1316
    %v1318 = vmul.f32 %v1299, 1.442695
    %v1319 = vpow.pop %v1318
    %v1320 = vmul.f32 %v1300, 1.442695
    %v1321 = vpow.pop %v1320
    %v1322 = vmul.f32 %v1301, 1.442695
    %v1323 = vpow.pop %v1322
    %v1324 = vmul.f32 %v1302, 1.442695
    %v1325 = vpow.pop %v1324
    %v1326 = vmul.f32 %v1303, 1.442695
    %v1327 = vpow.pop %v1326
    %v1328 = vmul.f32 %v1304, 1.442695
    %v1329 = vpow.pop %v1328
    %v1330 = vmul.f32 %v1305, 1.442695
    %v1331 = vpow.pop %v1330
    %v1332 = vmul.f32 %v1306, 1.442695
    %v1333 = vpow.pop %v1332
    %v1334 = vmul.f32 %v1307, 1.442695
    %v1335 = vpow.pop %v1334
    %v1336 = vmul.f32 %v1308, 1.442695
    %v1337 = vpow.pop %v1336
    %v1338 = vmul.f32 %v1309, 1.442695
    %v1339 = vpow.pop %v1338
    %v1340 = vmul.f32 %v1310, 1.442695
    %v1341 = vpow.pop %v1340
    %v1342 = vmul.f32 %v1311, 1.442695
    %v1343 = vpow.pop %v1342
    %v1344 = vadd.f32 %v1313, 1.0
    %v1345 = vlog2.pop %v1344
    %v1346 = vmul.f32 %v1345, 0.6931472
    %v1347 = vmul.f32 -0.5, %v1313
    %v1348 = vadd.f32 %v1347, 1.0
    %v1349 = vmul.f32 %v1348, %v1313
    %v1350 = vand.u32 2147483647, %v1313
    %vm1351 = vcmp.lt.f32.partialorder %v1350, 0.0004427343
    %v1352 = vsel %vm1351, %v1349, %v1346
    %v1353 = vadd.f32 %v1315, 1.0
    %v1354 = vlog2.pop %v1353
    %v1355 = vmul.f32 %v1354, 0.6931472
    %v1356 = vmul.f32 -0.5, %v1315
    %v1357 = vadd.f32 %v1356, 1.0
    %v1358 = vmul.f32 %v1357, %v1315
    %v1359 = vand.u32 2147483647, %v1315
    %vm1360 = vcmp.lt.f32.partialorder %v1359, 0.0004427343
    %v1361 = vsel %vm1360, %v1358, %v1355
    %v1362 = vadd.f32 %v1317, 1.0
    %v1363 = vlog2.pop %v1362
    %v1364 = vmul.f32 %v1363, 0.6931472
    %v1365 = vmul.f32 -0.5, %v1317
    %v1366 = vadd.f32 %v1365, 1.0
    %v1367 = vmul.f32 %v1366, %v1317
    %v1368 = vand.u32 2147483647, %v1317
    %vm1369 = vcmp.lt.f32.partialorder %v1368, 0.0004427343
    %v1370 = vsel %vm1369, %v1367, %v1364
    %v1371 = vadd.f32 %v1319, 1.0
    %v1372 = vlog2.pop %v1371
    %v1373 = vmul.f32 %v1372, 0.6931472
    %v1374 = vmul.f32 -0.5, %v1319
    %v1375 = vadd.f32 %v1374, 1.0
    %v1376 = vmul.f32 %v1375, %v1319
    %v1377 = vand.u32 2147483647, %v1319
    %vm1378 = vcmp.lt.f32.partialorder %v1377, 0.0004427343
    %v1379 = vsel %vm1378, %v1376, %v1373
    %v1380 = vadd.f32 %v1321, 1.0
    %v1381 = vlog2.pop %v1380
    %v1382 = vmul.f32 %v1381, 0.6931472
    %v1383 = vmul.f32 -0.5, %v1321
    %v1384 = vadd.f32 %v1383, 1.0
    %v1385 = vmul.f32 %v1384, %v1321
    %v1386 = vand.u32 2147483647, %v1321
    %vm1387 = vcmp.lt.f32.partialorder %v1386, 0.0004427343
    %v1388 = vsel %vm1387, %v1385, %v1382
    %v1389 = vadd.f32 %v1323, 1.0
    %v1390 = vlog2.pop %v1389
    %v1391 = vmul.f32 %v1390, 0.6931472
    %v1392 = vmul.f32 -0.5, %v1323
    %v1393 = vadd.f32 %v1392, 1.0
    %v1394 = vmul.f32 %v1393, %v1323
    %v1395 = vand.u32 2147483647, %v1323
    %vm1396 = vcmp.lt.f32.partialorder %v1395, 0.0004427343
    %v1397 = vsel %vm1396, %v1394, %v1391
    %v1398 = vadd.f32 %v1325, 1.0
    %v1399 = vlog2.pop %v1398
    %v1400 = vmul.f32 %v1399, 0.6931472
    %v1401 = vmul.f32 -0.5, %v1325
    %v1402 = vadd.f32 %v1401, 1.0
    %v1403 = vmul.f32 %v1402, %v1325
    %v1404 = vand.u32 2147483647, %v1325
    %vm1405 = vcmp.lt.f32.partialorder %v1404, 0.0004427343
    %v1406 = vsel %vm1405, %v1403, %v1400
    %v1407 = vadd.f32 %v1327, 1.0
    %v1408 = vlog2.pop %v1407
    %v1409 = vmul.f32 %v1408, 0.6931472
    %v1410 = vmul.f32 -0.5, %v1327
    %v1411 = vadd.f32 %v1410, 1.0
    %v1412 = vmul.f32 %v1411, %v1327
    %v1413 = vand.u32 2147483647, %v1327
    %vm1414 = vcmp.lt.f32.partialorder %v1413, 0.0004427343
    %v1415 = vsel %vm1414, %v1412, %v1409
    %v1416 = vadd.f32 %v1329, 1.0
    %v1417 = vlog2.pop %v1416
    %v1418 = vmul.f32 %v1417, 0.6931472
    %v1419 = vmul.f32 -0.5, %v1329
    %v1420 = vadd.f32 %v1419, 1.0
    %v1421 = vmul.f32 %v1420, %v1329
    %v1422 = vand.u32 2147483647, %v1329
    %vm1423 = vcmp.lt.f32.partialorder %v1422, 0.0004427343
    %v1424 = vsel %vm1423, %v1421, %v1418
    %v1425 = vadd.f32 %v1331, 1.0
    %v1426 = vlog2.pop %v1425
    %v1427 = vmul.f32 %v1426, 0.6931472
    %v1428 = vmul.f32 -0.5, %v1331
    %v1429 = vadd.f32 %v1428, 1.0
    %v1430 = vmul.f32 %v1429, %v1331
    %v1431 = vand.u32 2147483647, %v1331
    %vm1432 = vcmp.lt.f32.partialorder %v1431, 0.0004427343
    %v1433 = vsel %vm1432, %v1430, %v1427
    %v1434 = vadd.f32 %v1333, 1.0
    %v1435 = vlog2.pop %v1434
    %v1436 = vmul.f32 %v1435, 0.6931472
    %v1437 = vmul.f32 -0.5, %v1333
    %v1438 = vadd.f32 %v1437, 1.0
    %v1439 = vmul.f32 %v1438, %v1333
    %v1440 = vand.u32 2147483647, %v1333
    %vm1441 = vcmp.lt.f32.partialorder %v1440, 0.0004427343
    %v1442 = vsel %vm1441, %v1439, %v1436
    %v1443 = vadd.f32 %v1335, 1.0
    %v1444 = vlog2.pop %v1443
    %v1445 = vmul.f32 %v1444, 0.6931472
    %v1446 = vmul.f32 -0.5, %v1335
    %v1447 = vadd.f32 %v1446, 1.0
    %v1448 = vmul.f32 %v1447, %v1335
    %v1449 = vand.u32 2147483647, %v1335
    %vm1450 = vcmp.lt.f32.partialorder %v1449, 0.0004427343
    %v1451 = vsel %vm1450, %v1448, %v1445
    %v1452 = vadd.f32 %v1337, 1.0
    %v1453 = vlog2.pop %v1452
    %v1454 = vmul.f32 %v1453, 0.6931472
    %v1455 = vmul.f32 -0.5, %v1337
    %v1456 = vadd.f32 %v1455, 1.0
    %v1457 = vmul.f32 %v1456, %v1337
    %v1458 = vand.u32 2147483647, %v1337
    %vm1459 = vcmp.lt.f32.partialorder %v1458, 0.0004427343
    %v1460 = vsel %vm1459, %v1457, %v1454
    %v1461 = vadd.f32 %v1339, 1.0
    %v1462 = vlog2.pop %v1461
    %v1463 = vmul.f32 %v1462, 0.6931472
    %v1464 = vmul.f32 -0.5, %v1339
    %v1465 = vadd.f32 %v1464, 1.0
    %v1466 = vmul.f32 %v1465, %v1339
    %v1467 = vand.u32 2147483647, %v1339
    %vm1468 = vcmp.lt.f32.partialorder %v1467, 0.0004427343
    %v1469 = vsel %vm1468, %v1466, %v1463
    %v1470 = vadd.f32 %v1341, 1.0
    %v1471 = vlog2.pop %v1470
    %v1472 = vmul.f32 %v1471, 0.6931472
    %v1473 = vmul.f32 -0.5, %v1341
    %v1474 = vadd.f32 %v1473, 1.0
    %v1475 = vmul.f32 %v1474, %v1341
    %v1476 = vand.u32 2147483647, %v1341
    %vm1477 = vcmp.lt.f32.partialorder %v1476, 0.0004427343
    %v1478 = vsel %vm1477, %v1475, %v1472
    %v1479 = vadd.f32 %v1343, 1.0
    %v1480 = vlog2.pop %v1479
    %v1481 = vmul.f32 %v1480, 0.6931472
    %v1482 = vmul.f32 -0.5, %v1343
    %v1483 = vadd.f32 %v1482, 1.0
    %v1484 = vmul.f32 %v1483, %v1343
    %v1485 = vand.u32 2147483647, %v1343
    %vm1486 = vcmp.lt.f32.partialorder %v1485, 0.0004427343
    %v1487 = vsel %vm1486, %v1484, %v1481
    %v1488 = vadd.f32 %v1232, %v1352
    %v1489 = vadd.f32 %v1233, %v1361
    %v1490 = vadd.f32 %v1234, %v1370
    %v1491 = vadd.f32 %v1235, %v1379
    %v1492 = vadd.f32 %v1236, %v1388
    %v1493 = vadd.f32 %v1237, %v1397
    %v1494 = vadd.f32 %v1238, %v1406
    %v1495 = vadd.f32 %v1239, %v1415
    %v1496 = vadd.f32 %v1240, %v1424
    %v1497 = vadd.f32 %v1241, %v1433
    %v1498 = vadd.f32 %v1242, %v1442
    %v1499 = vadd.f32 %v1243, %v1451
    %v1500 = vadd.f32 %v1244, %v1460
    %v1501 = vadd.f32 %v1245, %v1469
    %v1502 = vadd.f32 %v1246, %v1478
    %v1503 = vadd.f32 %v1247, %v1487
    %v1504 = vsel %vm1248, %v1264, %v1488
    %v1505 = vsel %vm1249, %v1265, %v1489
    %v1506 = vsel %vm1250, %v1266, %v1490
    %v1507 = vsel %vm1251, %v1267, %v1491
    %v1508 = vsel %vm1252, %v1268, %v1492
    %v1509 = vsel %vm1253, %v1269, %v1493
    %v1510 = vsel %vm1254, %v1270, %v1494
    %v1511 = vsel %vm1255, %v1271, %v1495
    %v1512 = vsel %vm1256, %v1272, %v1496
    %v1513 = vsel %vm1257, %v1273, %v1497
    %v1514 = vsel %vm1258, %v1274, %v1498
    %v1515 = vsel %vm1259, %v1275, %v1499
    %v1516 = vsel %vm1260, %v1276, %v1500
    %v1517 = vsel %vm1261, %v1277, %v1501
    %v1518 = vsel %vm1262, %v1278, %v1502
    %v1519 = vsel %vm1263, %v1279, %v1503
    %v1536 = vlaneseq
    %v1537 = vshrl.u32 %v1536, 7
    %v1538 = vsub.s32 %v970, %v1537
    %v1539 = vrot.slane %v1504, %v1538
    %v1540 = vadd.s32 %v970, 4294967288
    %v1541 = vlaneseq
    %v1542 = vshrl.u32 %v1541, 7
    %v1543 = vsub.s32 %v1540, %v1542
    %v1544 = vrot.slane %v1505, %v1543
    %vm1545 = vcmask 130112
    %v1546 = vsel %vm1545, %v1544, %v1539
    %v1547 = vadd.s32 %v970, 4294967280
    %v1548 = vlaneseq
    %v1549 = vshrl.u32 %v1548, 7
    %v1550 = vsub.s32 %v1547, %v1549
    %v1551 = vrot.slane %v1506, %v1550
    %vm1552 = vcmask 195712
    %v1553 = vsel %vm1552, %v1551, %v1546
    %v1554 = vadd.s32 %v970, 4294967272
    %v1555 = vlaneseq
    %v1556 = vshrl.u32 %v1555, 7
    %v1557 = vsub.s32 %v1554, %v1556
    %v1558 = vrot.slane %v1507, %v1557
    %vm1559 = vcmask 261312
    %v1560 = vsel %vm1559, %v1558, %v1553
    %v1561 = vadd.s32 %v970, 4294967264
    %v1562 = vlaneseq
    %v1563 = vshrl.u32 %v1562, 7
    %v1564 = vsub.s32 %v1561, %v1563
    %v1565 = vrot.slane %v1508, %v1564
    %vm1566 = vcmask 326912
    %v1567 = vsel %vm1566, %v1565, %v1560
    %v1568 = vadd.s32 %v970, 4294967256
    %v1569 = vlaneseq
    %v1570 = vshrl.u32 %v1569, 7
    %v1571 = vsub.s32 %v1568, %v1570
    %v1572 = vrot.slane %v1509, %v1571
    %vm1573 = vcmask 392512
    %v1574 = vsel %vm1573, %v1572, %v1567
    %v1575 = vadd.s32 %v970, 4294967248
    %v1576 = vlaneseq
    %v1577 = vshrl.u32 %v1576, 7
    %v1578 = vsub.s32 %v1575, %v1577
    %v1579 = vrot.slane %v1510, %v1578
    %vm1580 = vcmask 458112
    %v1581 = vsel %vm1580, %v1579, %v1574
    %v1582 = vadd.s32 %v970, 4294967240
    %v1583 = vlaneseq
    %v1584 = vshrl.u32 %v1583, 7
    %v1585 = vsub.s32 %v1582, %v1584
    %v1586 = vrot.slane %v1511, %v1585
    %vm1587 = vcmask 523712
    %v1588 = vsel %vm1587, %v1586, %v1581
    %v1589 = vadd.s32 %v970, 4294967232
    %v1590 = vlaneseq
    %v1591 = vshrl.u32 %v1590, 7
    %v1592 = vsub.s32 %v1589, %v1591
    %v1593 = vrot.slane %v1512, %v1592
    %vm1594 = vcmask 589312
    %v1595 = vsel %vm1594, %v1593, %v1588
    %v1596 = vadd.s32 %v970, 4294967224
    %v1597 = vlaneseq
    %v1598 = vshrl.u32 %v1597, 7
    %v1599 = vsub.s32 %v1596, %v1598
    %v1600 = vrot.slane %v1513, %v1599
    %vm1601 = vcmask 654912
    %v1602 = vsel %vm1601, %v1600, %v1595
    %v1603 = vadd.s32 %v970, 4294967216
    %v1604 = vlaneseq
    %v1605 = vshrl.u32 %v1604, 7
    %v1606 = vsub.s32 %v1603, %v1605
    %v1607 = vrot.slane %v1514, %v1606
    %vm1608 = vcmask 720512
    %v1609 = vsel %vm1608, %v1607, %v1602
    %v1610 = vadd.s32 %v970, 4294967208
    %v1611 = vlaneseq
    %v1612 = vshrl.u32 %v1611, 7
    %v1613 = vsub.s32 %v1610, %v1612
    %v1614 = vrot.slane %v1515, %v1613
    %vm1615 = vcmask 786112
    %v1616 = vsel %vm1615, %v1614, %v1609
    %v1617 = vadd.s32 %v970, 4294967200
    %v1618 = vlaneseq
    %v1619 = vshrl.u32 %v1618, 7
    %v1620 = vsub.s32 %v1617, %v1619
    %v1621 = vrot.slane %v1516, %v1620
    %vm1622 = vcmask 851712
    %v1623 = vsel %vm1622, %v1621, %v1616
    %v1624 = vadd.s32 %v970, 4294967192
    %v1625 = vlaneseq
    %v1626 = vshrl.u32 %v1625, 7
    %v1627 = vsub.s32 %v1624, %v1626
    %v1628 = vrot.slane %v1517, %v1627
    %vm1629 = vcmask 917312
    %v1630 = vsel %vm1629, %v1628, %v1623
    %v1631 = vadd.s32 %v970, 4294967184
    %v1632 = vlaneseq
    %v1633 = vshrl.u32 %v1632, 7
    %v1634 = vsub.s32 %v1631, %v1633
    %v1635 = vrot.slane %v1518, %v1634
    %vm1636 = vcmask 982912
    %v1637 = vsel %vm1636, %v1635, %v1630
    %v1638 = vadd.s32 %v970, 4294967176
    %v1639 = vlaneseq
    %v1640 = vshrl.u32 %v1639, 7
    %v1641 = vsub.s32 %v1638, %v1640
    %v1642 = vrot.slane %v1519, %v1641
    %vm1643 = vcmask 1048512
    %v1644 = vsel %vm1643, %v1642, %v1637
    %1646 = vst [vmem:[#allocation2] sm:$0x1] %v1644
    // Predicated region
    $region34: #{tpu_custom_call.1} parent=1 // pred_check
      _
    $region35: #{tpu_custom_call.1} parent=1 // pred_check_branch
      %1648 = sbr.rel (0) target = $region37
    $region36: #{tpu_custom_call.1} parent=1 // pred_region
      %s1650 = ssub.s32 16, 16
      %1651 = vsyncadd [#allocation3], %s1650
      %s1653 = sshll.u32 [#allocation2], 4
      %s1654 = int_to_ptr.vmem [resolvable:$true] %s1653
      %1656 = dma.vmem_to_hbm [thread:$0]  %s1654, 16, %s8, [#allocation3]
    $region37: #{tpu_custom_call.1} parent=1 // pred_fallthru
      _
    // Predicated region
    $region38: #{tpu_custom_call.1} parent=1 // pred_check
      _
    $region39: #{tpu_custom_call.1} parent=1 // pred_check_branch
      %1658 = sbr.rel (0) target = $region41
    $region40: #{tpu_custom_call.1} parent=1 // pred_region
      _
    $region41: #{tpu_custom_call.1} parent=1 // pred_fallthru
      _
    // Predicated region
    $region42: #{tpu_custom_call.1} parent=1 // pred_check
      _
    $region43: #{tpu_custom_call.1} parent=1 // pred_check_branch
      %1660 = sbr.rel (0) target = $region45
    $region44: #{tpu_custom_call.1} parent=1 // pred_region
      %1661 = dma.done [#allocation3], 16
    $region45: #{tpu_custom_call.1} parent=1 // pred_fallthru
      _
    // Predicated region
    $region46: #{tpu_custom_call.1} parent=1 // pred_check
      _
    $region47: #{tpu_custom_call.1} parent=1 // pred_check_branch
      %1663 = sbr.rel (0) target = $region49
    $region48: #{tpu_custom_call.1} parent=1 // pred_region
      _
    $region49: #{tpu_custom_call.1} parent=1 // pred_fallthru
      _
    %1664 = vsyncpa [#allocation3], 1

</llo_original>
